<compile_context>
chip_gen: v6e
topology: v6e:2x2x1
jax: 0.10.0
libtpu: 0.0.40
codegen_flags: <defaults>
</compile_context>

<pallas_src>
import jax
import jax.numpy as jnp
from jax.experimental import pallas as pl
from jax.experimental.pallas import tpu as pltpu

LANES = 128                       # TPU lane width; matmul outputs padded to this
C1PAD = 8                         # conv1 stored channels (6 real + 2 zero)
_VMEM_LIMIT = 32 * 1024 * 1024    # scoped-VMEM request; safe on v5e/v6e/v7x
_MIN_ROWS_TO_SPLIT = 256          # below this a single grid step is cheaper


def _round_up(x, m):
    return ((x + m - 1) // m) * m


def _pick_tile(m, target=2048):
    """Row-tile size: fixed tile (multiple of 8) with a ragged, masked edge
    block -- safe because every kernel op is row-local.  Arrays with >= 256
    rows always get >= 2 grid steps (megacore on v7x); big arrays are capped
    at `target` to amortize per-step overhead without stressing VMEM."""
    if m < _MIN_ROWS_TO_SPLIT:
        return m
    return min(target, _round_up(pl.cdiv(m, 2), 8))


# ----------------------------- Pallas kernels ------------------------------

def _conv1_fused_kernel(p_ref, w_ref, b_ref, o_ref):
    """conv1 + bias + ReLU + 2x2 max-pool as ONE matmul.

    p_ref : (tm, 4*25) bf16   four pooling-quadrant patch sets, concatenated
    w_ref : (100, 512) bf16   block-diagonal: quadrant q -> columns [q*128,(q+1)*128)
    b_ref : (1, 128)   f32
    o_ref : (tm, 8)    bf16   pooled activation (6 real channels + 2 zero)
    """
    y = jnp.dot(p_ref[...], w_ref[...], preferred_element_type=jnp.float32)
    nq = y.shape[-1] // LANES
    mx = y[:, :LANES]
    for q in range(1, nq):                       # max over lane-aligned slices
        mx = jnp.maximum(mx, y[:, q * LANES:(q + 1) * LANES])
    a = jnp.maximum(mx + b_ref[...], 0.0)        # bias/ReLU commute with max
    o_ref[...] = a[:, :o_ref.shape[-1]].astype(o_ref.dtype)


def _conv_relu_pool_kernel(p0_ref, p1_ref, p2_ref, p3_ref, w_ref, b_ref, o_ref):
    """conv2 + bias + ReLU + 2x2 max-pool (four quadrant matmuls).

    p{q}_ref : (tm, K*K*C1PAD) bf16 im2col patches of pooling quadrant q
    w_ref    : (K*K*C1PAD, 128) bf16 (Cout zero-padded to 128 lanes)
    b_ref    : (1, 128) f32
    o_ref    : (tm, 128) bf16 lane-dense pooled activation
    """
    w = w_ref[...]

    def quad(p_ref):
        return jnp.dot(p_ref[...], w, preferred_element_type=jnp.float32)

    y = jnp.maximum(jnp.maximum(quad(p0_ref), quad(p1_ref)),
                    jnp.maximum(quad(p2_ref), quad(p3_ref)))
    o_ref[...] = jnp.maximum(y + b_ref[...], 0.0).astype(o_ref.dtype)


def _fc_stack_kernel(x_ref, w1_ref, b1_ref, w2_ref, b2_ref, w3_ref, b3_ref,
                     o_ref):
    """Fused fc1->relu->fc2->relu->fc3; intermediates stay on-chip.
    All weights are padded to 128 output lanes; fc1 rows are zero-expanded to
    consume conv2's lane-dense (h, w, c_pad) layout directly."""
    h = jnp.dot(x_ref[...], w1_ref[...], preferred_element_type=jnp.float32)
    h = jnp.maximum(h + b1_ref[...], 0.0)
    h = jnp.dot(h.astype(jnp.bfloat16), w2_ref[...],
                preferred_element_type=jnp.float32)
    h = jnp.maximum(h + b2_ref[...], 0.0)
    y = jnp.dot(h.astype(jnp.bfloat16), w3_ref[...],
                preferred_element_type=jnp.float32)
    o_ref[...] = y + b3_ref[...]


# ----------------------------- kernel wrappers ------------------------------

def conv1_relu_pool(patches, w_bd, b_row):
    m, kdim = patches.shape
    nout = w_bd.shape[1]
    tm = _pick_tile(m)
    grid = (pl.cdiv(m, tm),)
    flops = 2 * m * kdim * nout
    bytes_accessed = m * kdim * 2 + kdim * nout * 2 + LANES * 4 + m * C1PAD * 2
    return pl.pallas_call(
        _conv1_fused_kernel,
        out_shape=jax.ShapeDtypeStruct((m, C1PAD), jnp.bfloat16),
        grid=grid,
        in_specs=[pl.BlockSpec((tm, kdim), lambda i: (i, 0)),
                  pl.BlockSpec(w_bd.shape, lambda i: (0, 0)),
                  pl.BlockSpec((1, LANES), lambda i: (0, 0))],
        out_specs=pl.BlockSpec((tm, C1PAD), lambda i: (i, 0)),
        compiler_params=pltpu.CompilerParams(
            dimension_semantics=("parallel",),
            vmem_limit_bytes=_VMEM_LIMIT),
        cost_estimate=pl.CostEstimate(flops=flops, transcendentals=0,
                                      bytes_accessed=bytes_accessed),
    )(patches, w_bd, b_row)


def conv_relu_pool(quads, w_flat, b_row):
    m, kdim = quads[0].shape
    tm = _pick_tile(m)
    grid = (pl.cdiv(m, tm),)
    patch_spec = pl.BlockSpec((tm, kdim), lambda i: (i, 0))
    flops = 4 * 2 * m * kdim * LANES
    bytes_accessed = (4 * m * kdim * 2 + kdim * LANES * 2
                      + LANES * 4 + m * LANES * 2)
    return pl.pallas_call(
        _conv_relu_pool_kernel,
        out_shape=jax.ShapeDtypeStruct((m, LANES), jnp.bfloat16),
        grid=grid,
        in_specs=[patch_spec, patch_spec, patch_spec, patch_spec,
                  pl.BlockSpec((kdim, LANES), lambda i: (0, 0)),
                  pl.BlockSpec((1, LANES), lambda i: (0, 0))],
        out_specs=pl.BlockSpec((tm, LANES), lambda i: (i, 0)),
        compiler_params=pltpu.CompilerParams(
            dimension_semantics=("parallel",),
            vmem_limit_bytes=_VMEM_LIMIT),
        cost_estimate=pl.CostEstimate(flops=flops, transcendentals=0,
                                      bytes_accessed=bytes_accessed),
    )(*quads, w_flat, b_row)


def fc_stack(x, w1, b1, w2, b2, w3, b3):
    m, kin = x.shape
    tm = _pick_tile(m, target=1024)
    grid = (pl.cdiv(m, tm),)
    flops = 2 * m * (kin * LANES + LANES * LANES + LANES * LANES)
    bytes_accessed = (m * kin * 2
                      + (kin * LANES + 2 * LANES * LANES) * 2
                      + 3 * LANES * 4 + m * LANES * 4)
    return pl.pallas_call(
        _fc_stack_kernel,
        out_shape=jax.ShapeDtypeStruct((m, LANES), jnp.float32),
        grid=grid,
        in_specs=[pl.BlockSpec((tm, kin), lambda i: (i, 0)),
                  pl.BlockSpec(w1.shape, lambda i: (0, 0)),
                  pl.BlockSpec(b1.shape, lambda i: (0, 0)),
                  pl.BlockSpec(w2.shape, lambda i: (0, 0)),
                  pl.BlockSpec(b2.shape, lambda i: (0, 0)),
                  pl.BlockSpec(w3.shape, lambda i: (0, 0)),
                  pl.BlockSpec(b3.shape, lambda i: (0, 0))],
        out_specs=pl.BlockSpec((tm, LANES), lambda i: (i, 0)),
        compiler_params=pltpu.CompilerParams(
            dimension_semantics=("parallel",),
            vmem_limit_bytes=_VMEM_LIMIT),
        cost_estimate=pl.CostEstimate(flops=flops, transcendentals=0,
                                      bytes_accessed=bytes_accessed),
    )(x, w1, b1, w2, b2, w3, b3)


# ------------------------------- JAX glue -----------------------------------

def _quadrant_patches(x_nhwc, k, concat=False):
    """im2col grouped by 2x2 pooling quadrant (channels-last, lane-friendly).

    Returns four (N*PH*PW, k*k*C) matrices (feature order kh, kw, c); row r of
    quadrant (di, dj) is the conv patch whose output lands at pooled position r
    with offset (di, dj) inside its 2x2 pooling window.  With concat=True the
    four are concatenated along features (order q00,q01,q10,q11)."""
    n, h, w, c = x_nhwc.shape
    oh, ow = h - k + 1, w - k + 1
    ph, pw = oh // 2, ow // 2
    quads = []
    for di in range(2):
        for dj in range(2):
            cols = []
            for kh in range(k):
                for kw in range(k):
                    r0, c0 = di + kh, dj + kw
                    cols.append(x_nhwc[:, r0:r0 + 2 * ph:2,
                                       c0:c0 + 2 * pw:2, :])
            q = jnp.concatenate(cols, axis=-1).reshape(n * ph * pw, k * k * c)
            quads.append(q)
    if concat:
        return jnp.concatenate(quads, axis=-1)
    return quads


@jax.jit
def garment_classifier(params, x):
    """x: (N, 1, 28, 28) float32 NCHW (PyTorch convention). Returns (N, 10)."""
    n = x.shape[0]
    xh = jnp.transpose(x, (0, 2, 3, 1)).astype(jnp.bfloat16)       # NHWC

    p1 = _quadrant_patches(xh, 5, concat=True)                     # (N*144, 100)
    y1 = conv1_relu_pool(p1, params["conv1_w"], params["conv1_b"])  # (N*144, 8) bf16
    y1 = y1.reshape(n, 12, 12, C1PAD)                              # no channel slice

    q2 = _quadrant_patches(y1, 5)                                  # 4 x (N*16, 200)
    y2 = conv_relu_pool(q2, params["conv2_w"], params["conv2_b"])   # (N*16, 128) bf16
    y2 = y2.reshape(n, 16 * LANES)                                 # (N, 2048), no slice

    logits = fc_stack(y2,
                      params["fc1_w"], params["fc1_b"],
                      params["fc2_w"], params["fc2_b"],
                      params["fc3_w"], params["fc3_b"])            # (N, 128) f32
    return logits[:, :10]


# ------------------------------ parameters ----------------------------------

def init_raw_params(key):
    """PyTorch-layout parameters with PyTorch-style uniform init."""
    ks = jax.random.split(key, 10)

    def u(k, shape, fan_in):
        bound = 1.0 / jnp.sqrt(jnp.float32(fan_in))
        return jax.random.uniform(k, shape, jnp.float32, -bound, bound)

    return {
        "conv1_w": u(ks[0], (6, 1, 5, 5), 1 * 5 * 5),
        "conv1_b": u(ks[1], (6,), 1 * 5 * 5),
        "conv2_w": u(ks[2], (16, 6, 5, 5), 6 * 5 * 5),
        "conv2_b": u(ks[3], (16,), 6 * 5 * 5),
        "fc1_w": u(ks[4], (120, 256), 256),
        "fc1_b": u(ks[5], (120,), 256),
        "fc2_w": u(ks[6], (84, 120), 120),
        "fc2_b": u(ks[7], (84,), 120),
        "fc3_w": u(ks[8], (10, 84), 84),
        "fc3_b": u(ks[9], (10,), 84),
    }


def _pad_cols(a, n):
    return jnp.pad(a, ((0, 0), (0, n - a.shape[1])))


def prepare_params(raw):
    """One-time weight prep (hoisted out of the forward pass).

    Zero padding is exact: padded output columns stay 0 through ReLU/max and
    the matching padded rows of the next layer's weight are 0, so results equal
    the unpadded network (up to bf16 operand rounding)."""
    k = 5

    # conv1: block-diagonal over the 4 pooling quadrants (one MXU matmul).
    w1f = jnp.transpose(raw["conv1_w"], (2, 3, 1, 0)).reshape(k * k * 1, 6)
    w1f = _pad_cols(w1f, LANES)                                     # (25, 128)
    c1w = jnp.zeros((4 * k * k, 4 * LANES), jnp.float32)
    for q in range(4):
        c1w = c1w.at[q * k * k:(q + 1) * k * k,
                     q * LANES:(q + 1) * LANES].set(w1f)
    c1w = c1w.astype(jnp.bfloat16)                                  # (100, 512)
    c1b = _pad_cols(raw["conv1_b"].reshape(1, 6), LANES)            # (1, 128) f32

    # conv2: input channels padded 6 -> C1PAD to match conv1's stored layout.
    w2f = jnp.transpose(raw["conv2_w"], (2, 3, 1, 0))               # (5,5,6,16)
    w2f = jnp.pad(w2f, ((0, 0), (0, 0), (0, C1PAD - 6), (0, 0)))    # (5,5,8,16)
    c2w = _pad_cols(w2f.reshape(k * k * C1PAD, 16), LANES)          # (200, 128)
    c2w = c2w.astype(jnp.bfloat16)
    c2b = _pad_cols(raw["conv2_b"].reshape(1, 16), LANES)

    # fc1 consumes conv2's lane-dense (h, w, c_pad) layout directly:
    # torch row order is (c, h, w) -> rearrange to (h, w, c), pad c 16 -> 128.
    w1 = raw["fc1_w"].T.reshape(16, 4, 4, 120).transpose(1, 2, 0, 3)  # (4,4,16,120)
    w1 = jnp.pad(w1, ((0, 0), (0, 0), (0, LANES - 16), (0, 0)))       # (4,4,128,120)
    w1 = _pad_cols(w1.reshape(4 * 4 * LANES, 120), LANES).astype(jnp.bfloat16)
    b1 = _pad_cols(raw["fc1_b"].reshape(1, 120), LANES)

    w2 = jnp.pad(raw["fc2_w"].T, ((0, LANES - 120), (0, LANES - 84)))
    w2 = w2.astype(jnp.bfloat16)
    b2 = _pad_cols(raw["fc2_b"].reshape(1, 84), LANES)

    # fc3 lane-dense: pad to 128 output columns, wrapper slices [:, :10].
    w3 = jnp.pad(raw["fc3_w"].T, ((0, LANES - 84), (0, LANES - 10)))
    w3 = w3.astype(jnp.bfloat16)
    b3 = _pad_cols(raw["fc3_b"].reshape(1, 10), LANES)

    return {"conv1_w": c1w, "conv1_b": c1b, "conv2_w": c2w, "conv2_b": c2b,
            "fc1_w": w1, "fc1_b": b1, "fc2_w": w2, "fc2_b": b2,
            "fc3_w": w3, "fc3_b": b3}


# --------------------------- pure-JAX f32 reference --------------------------

def reference_forward(raw, x):
    """f32 reference matching the PyTorch module exactly (NCHW layouts)."""
    def conv(y, w, b):
        y = jax.lax.conv_general_dilated(
            y, w, window_strides=(1, 1), padding="VALID",
            dimension_numbers=("NCHW", "OIHW", "NCHW"))
        return jnp.maximum(y + b[None, :, None, None], 0.0)

    def pool(y):
        return jax.lax.reduce_window(y, -jnp.inf, jax.lax.max,
                                     (1, 1, 2, 2), (1, 1, 2, 2), "VALID")

    y = pool(conv(x, raw["conv1_w"], raw["conv1_b"]))
    y = pool(conv(y, raw["conv2_w"], raw["conv2_b"]))
    y = y.reshape(x.shape[0], -1)                       # (N, 256), (c,h,w) order
    y = jnp.maximum(y @ raw["fc1_w"].T + raw["fc1_b"], 0.0)
    y = jnp.maximum(y @ raw["fc2_w"].T + raw["fc2_b"], 0.0)
    return y @ raw["fc3_w"].T + raw["fc3_b"]


if __name__ == "__main__":
    key = jax.random.PRNGKey(0)
    pkey, xkey = jax.random.split(key)
    raw = init_raw_params(pkey)
    params = prepare_params(raw)
    # Spatial size is fixed at 28x28 by fc1's 16*4*4 input; small batch.
    x = jax.random.normal(xkey, (2, 1, 28, 28), jnp.float32)

    out = jax.block_until_ready(garment_classifier(params, x))
    assert out.shape == (2, 10)
    assert bool(jnp.all(jnp.isfinite(out)))

    # bf16 operands / bf16 inter-layer storage -> loose tolerance vs f32 ref.
    ref = reference_forward(raw, x)
    err = float(jnp.max(jnp.abs(out - ref)))
    assert err < 0.1, f"max |pallas - reference| too large: {err}"

    print("KERNEL_OK")
</pallas_src>

<mosaic_0001>
module attributes {stable_mosaic.version = 11 : i64} {
  func.func @_conv1_fused_kernel(%arg0: i32, %arg1: memref<144x100xbf16, #tpu.memory_space<vmem>>, %arg2: memref<100x512xbf16, #tpu.memory_space<vmem>>, %arg3: memref<1x128xf32, #tpu.memory_space<vmem>>, %arg4: memref<144x8xbf16, #tpu.memory_space<vmem>>) attributes {dimension_semantics = [#tpu.dimension_semantics<parallel>], iteration_bounds = array<i64: 2>, scalar_prefetch = 0 : i64, scratch_operands = 0 : i64, tpu.core_type = #tpu.core_type<tc>, window_params = [{transform_indices = @transform_0, window_bounds = array<i64: 144, 100>}, {pipeline_mode = #tpu.pipeline_mode<synchronous>, transform_indices = @transform_1, window_bounds = array<i64: 100, 512>}, {pipeline_mode = #tpu.pipeline_mode<synchronous>, transform_indices = @transform_2, window_bounds = array<i64: 1, 128>}, {transform_indices = @transform_3, window_bounds = array<i64: 144, 8>}]} {
    %c0 = arith.constant 0 : index
    %c0_0 = arith.constant 0 : index
    %0 = vector.load %arg1[%c0, %c0_0] : memref<144x100xbf16, #tpu.memory_space<vmem>>, vector<144x100xbf16>
    %c0_1 = arith.constant 0 : index
    %c0_2 = arith.constant 0 : index
    %1 = vector.load %arg2[%c0_1, %c0_2] : memref<100x512xbf16, #tpu.memory_space<vmem>>, vector<100x512xbf16>
    %cst = arith.constant dense<0.000000e+00> : vector<144x512xf32>
    %2 = tpu.matmul %0, %1, %cst {dimension_numbers = #tpu.dot_dimension_numbers<[1], [0], [0], [1], [0, 0, 1, 1], [], []>} : vector<144x100xbf16>, vector<100x512xbf16>, vector<144x512xf32> -> vector<144x512xf32>
    %3 = vector.extract_strided_slice %2 {offsets = [0, 0], sizes = [144, 128], strides = [1, 1]} : vector<144x512xf32> to vector<144x128xf32>
    %4 = vector.extract_strided_slice %2 {offsets = [0, 128], sizes = [144, 128], strides = [1, 1]} : vector<144x512xf32> to vector<144x128xf32>
    %5 = arith.maximumf %3, %4 : vector<144x128xf32>
    %6 = vector.extract_strided_slice %2 {offsets = [0, 256], sizes = [144, 128], strides = [1, 1]} : vector<144x512xf32> to vector<144x128xf32>
    %7 = arith.maximumf %5, %6 : vector<144x128xf32>
    %8 = vector.extract_strided_slice %2 {offsets = [0, 384], sizes = [144, 128], strides = [1, 1]} : vector<144x512xf32> to vector<144x128xf32>
    %9 = arith.maximumf %7, %8 : vector<144x128xf32>
    %c0_3 = arith.constant 0 : index
    %c0_4 = arith.constant 0 : index
    %10 = vector.load %arg3[%c0_3, %c0_4] : memref<1x128xf32, #tpu.memory_space<vmem>>, vector<1x128xf32>
    %11 = vector.broadcast %10 : vector<1x128xf32> to vector<144x128xf32>
    %12 = arith.addf %9, %11 : vector<144x128xf32>
    %cst_5 = arith.constant 0.000000e+00 : f32
    %13 = vector.broadcast %cst_5 : f32 to vector<144x128xf32>
    %14 = arith.maximumf %12, %13 : vector<144x128xf32>
    %15 = vector.extract_strided_slice %14 {offsets = [0, 0], sizes = [144, 8], strides = [1, 1]} : vector<144x128xf32> to vector<144x8xf32>
    %16 = arith.truncf %15 : vector<144x8xf32> to vector<144x8xbf16>
    %c0_6 = arith.constant 0 : index
    %c0_7 = arith.constant 0 : index
    %17 = vector.load %arg4[%c0_6, %c0_7] : memref<144x8xbf16, #tpu.memory_space<vmem>>, vector<144x8xbf16>
    tpu.vector_store %arg4[%c0_6, %c0_7], %16 {strides = array<i32>} : memref<144x8xbf16, #tpu.memory_space<vmem>>, vector<144x8xbf16>,
    return
  }
  func.func @transform_0(%arg0: i32) -> (i32, i32) {
    %c0_i32 = arith.constant 0 : i32
    %c0_i32_0 = arith.constant 0 : i32
    return %arg0, %c0_i32 : i32, i32
  }
  func.func @transform_1(%arg0: i32) -> (i32, i32) {
    %c0_i32 = arith.constant 0 : i32
    %c0_i32_0 = arith.constant 0 : i32
    %c0_i32_1 = arith.constant 0 : i32
    return %c0_i32, %c0_i32_0 : i32, i32
  }
  func.func @transform_2(%arg0: i32) -> (i32, i32) {
    %c0_i32 = arith.constant 0 : i32
    %c0_i32_0 = arith.constant 0 : i32
    %c0_i32_1 = arith.constant 0 : i32
    return %c0_i32, %c0_i32_0 : i32, i32
  }
  func.func @transform_3(%arg0: i32) -> (i32, i32) {
    %c0_i32 = arith.constant 0 : i32
    %c0_i32_0 = arith.constant 0 : i32
    return %arg0, %c0_i32 : i32, i32
  }
}

module attributes {stable_mosaic.version = 11 : i64} {
  func.func @_conv_relu_pool_kernel(%arg0: i32, %arg1: memref<32x200xbf16, #tpu.memory_space<vmem>>, %arg2: memref<32x200xbf16, #tpu.memory_space<vmem>>, %arg3: memref<32x200xbf16, #tpu.memory_space<vmem>>, %arg4: memref<32x200xbf16, #tpu.memory_space<vmem>>, %arg5: memref<200x128xbf16, #tpu.memory_space<vmem>>, %arg6: memref<1x128xf32, #tpu.memory_space<vmem>>, %arg7: memref<32x128xbf16, #tpu.memory_space<vmem>>) attributes {dimension_semantics = [#tpu.dimension_semantics<parallel>], iteration_bounds = array<i64: 1>, scalar_prefetch = 0 : i64, scratch_operands = 0 : i64, tpu.core_type = #tpu.core_type<tc>, window_params = [{transform_indices = @transform_0, window_bounds = array<i64: 32, 200>}, {transform_indices = @transform_1, window_bounds = array<i64: 32, 200>}, {transform_indices = @transform_2, window_bounds = array<i64: 32, 200>}, {transform_indices = @transform_3, window_bounds = array<i64: 32, 200>}, {pipeline_mode = #tpu.pipeline_mode<synchronous>, transform_indices = @transform_4, window_bounds = array<i64: 200, 128>}, {pipeline_mode = #tpu.pipeline_mode<synchronous>, transform_indices = @transform_5, window_bounds = array<i64: 1, 128>}, {transform_indices = @transform_6, window_bounds = array<i64: 32, 128>}]} {
    %c0 = arith.constant 0 : index
    %c0_0 = arith.constant 0 : index
    %0 = vector.load %arg5[%c0, %c0_0] : memref<200x128xbf16, #tpu.memory_space<vmem>>, vector<200x128xbf16>
    %c0_1 = arith.constant 0 : index
    %c0_2 = arith.constant 0 : index
    %1 = vector.load %arg1[%c0_1, %c0_2] : memref<32x200xbf16, #tpu.memory_space<vmem>>, vector<32x200xbf16>
    %cst = arith.constant dense<0.000000e+00> : vector<32x128xf32>
    %2 = tpu.matmul %1, %0, %cst {dimension_numbers = #tpu.dot_dimension_numbers<[1], [0], [0], [1], [0, 0, 1, 1], [], []>} : vector<32x200xbf16>, vector<200x128xbf16>, vector<32x128xf32> -> vector<32x128xf32>
    %c0_3 = arith.constant 0 : index
    %c0_4 = arith.constant 0 : index
    %3 = vector.load %arg2[%c0_3, %c0_4] : memref<32x200xbf16, #tpu.memory_space<vmem>>, vector<32x200xbf16>
    %cst_5 = arith.constant dense<0.000000e+00> : vector<32x128xf32>
    %4 = tpu.matmul %3, %0, %cst_5 {dimension_numbers = #tpu.dot_dimension_numbers<[1], [0], [0], [1], [0, 0, 1, 1], [], []>} : vector<32x200xbf16>, vector<200x128xbf16>, vector<32x128xf32> -> vector<32x128xf32>
    %5 = arith.maximumf %2, %4 : vector<32x128xf32>
    %c0_6 = arith.constant 0 : index
    %c0_7 = arith.constant 0 : index
    %6 = vector.load %arg3[%c0_6, %c0_7] : memref<32x200xbf16, #tpu.memory_space<vmem>>, vector<32x200xbf16>
    %cst_8 = arith.constant dense<0.000000e+00> : vector<32x128xf32>
    %7 = tpu.matmul %6, %0, %cst_8 {dimension_numbers = #tpu.dot_dimension_numbers<[1], [0], [0], [1], [0, 0, 1, 1], [], []>} : vector<32x200xbf16>, vector<200x128xbf16>, vector<32x128xf32> -> vector<32x128xf32>
    %c0_9 = arith.constant 0 : index
    %c0_10 = arith.constant 0 : index
    %8 = vector.load %arg4[%c0_9, %c0_10] : memref<32x200xbf16, #tpu.memory_space<vmem>>, vector<32x200xbf16>
    %cst_11 = arith.constant dense<0.000000e+00> : vector<32x128xf32>
    %9 = tpu.matmul %8, %0, %cst_11 {dimension_numbers = #tpu.dot_dimension_numbers<[1], [0], [0], [1], [0, 0, 1, 1], [], []>} : vector<32x200xbf16>, vector<200x128xbf16>, vector<32x128xf32> -> vector<32x128xf32>
    %10 = arith.maximumf %7, %9 : vector<32x128xf32>
    %11 = arith.maximumf %5, %10 : vector<32x128xf32>
    %c0_12 = arith.constant 0 : index
    %c0_13 = arith.constant 0 : index
    %12 = vector.load %arg6[%c0_12, %c0_13] : memref<1x128xf32, #tpu.memory_space<vmem>>, vector<1x128xf32>
    %13 = vector.broadcast %12 : vector<1x128xf32> to vector<32x128xf32>
    %14 = arith.addf %11, %13 : vector<32x128xf32>
    %cst_14 = arith.constant 0.000000e+00 : f32
    %15 = vector.broadcast %cst_14 : f32 to vector<32x128xf32>
    %16 = arith.maximumf %14, %15 : vector<32x128xf32>
    %17 = arith.truncf %16 : vector<32x128xf32> to vector<32x128xbf16>
    %c0_15 = arith.constant 0 : index
    %c0_16 = arith.constant 0 : index
    %18 = vector.load %arg7[%c0_15, %c0_16] : memref<32x128xbf16, #tpu.memory_space<vmem>>, vector<32x128xbf16>
    tpu.vector_store %arg7[%c0_15, %c0_16], %17 {strides = array<i32>} : memref<32x128xbf16, #tpu.memory_space<vmem>>, vector<32x128xbf16>,
    return
  }
  func.func @transform_0(%arg0: i32) -> (i32, i32) {
    %c0_i32 = arith.constant 0 : i32
    %c0_i32_0 = arith.constant 0 : i32
    return %arg0, %c0_i32 : i32, i32
  }
  func.func @transform_1(%arg0: i32) -> (i32, i32) {
    %c0_i32 = arith.constant 0 : i32
    %c0_i32_0 = arith.constant 0 : i32
    return %arg0, %c0_i32 : i32, i32
  }
  func.func @transform_2(%arg0: i32) -> (i32, i32) {
    %c0_i32 = arith.constant 0 : i32
    %c0_i32_0 = arith.constant 0 : i32
    return %arg0, %c0_i32 : i32, i32
  }
  func.func @transform_3(%arg0: i32) -> (i32, i32) {
    %c0_i32 = arith.constant 0 : i32
    %c0_i32_0 = arith.constant 0 : i32
    return %arg0, %c0_i32 : i32, i32
  }
  func.func @transform_4(%arg0: i32) -> (i32, i32) {
    %c0_i32 = arith.constant 0 : i32
    %c0_i32_0 = arith.constant 0 : i32
    %c0_i32_1 = arith.constant 0 : i32
    return %c0_i32, %c0_i32_0 : i32, i32
  }
  func.func @transform_5(%arg0: i32) -> (i32, i32) {
    %c0_i32 = arith.constant 0 : i32
    %c0_i32_0 = arith.constant 0 : i32
    %c0_i32_1 = arith.constant 0 : i32
    return %c0_i32, %c0_i32_0 : i32, i32
  }
  func.func @transform_6(%arg0: i32) -> (i32, i32) {
    %c0_i32 = arith.constant 0 : i32
    %c0_i32_0 = arith.constant 0 : i32
    return %arg0, %c0_i32 : i32, i32
  }
}

module attributes {stable_mosaic.version = 11 : i64} {
  func.func @_fc_stack_kernel(%arg0: i32, %arg1: memref<2x2048xbf16, #tpu.memory_space<vmem>>, %arg2: memref<2048x128xbf16, #tpu.memory_space<vmem>>, %arg3: memref<1x128xf32, #tpu.memory_space<vmem>>, %arg4: memref<128x128xbf16, #tpu.memory_space<vmem>>, %arg5: memref<1x128xf32, #tpu.memory_space<vmem>>, %arg6: memref<128x128xbf16, #tpu.memory_space<vmem>>, %arg7: memref<1x128xf32, #tpu.memory_space<vmem>>, %arg8: memref<2x128xf32, #tpu.memory_space<vmem>>) attributes {dimension_semantics = [#tpu.dimension_semantics<parallel>], iteration_bounds = array<i64: 1>, scalar_prefetch = 0 : i64, scratch_operands = 0 : i64, tpu.core_type = #tpu.core_type<tc>, window_params = [{transform_indices = @transform_0, window_bounds = array<i64: 2, 2048>}, {pipeline_mode = #tpu.pipeline_mode<synchronous>, transform_indices = @transform_1, window_bounds = array<i64: 2048, 128>}, {pipeline_mode = #tpu.pipeline_mode<synchronous>, transform_indices = @transform_2, window_bounds = array<i64: 1, 128>}, {pipeline_mode = #tpu.pipeline_mode<synchronous>, transform_indices = @transform_3, window_bounds = array<i64: 128, 128>}, {pipeline_mode = #tpu.pipeline_mode<synchronous>, transform_indices = @transform_4, window_bounds = array<i64: 1, 128>}, {pipeline_mode = #tpu.pipeline_mode<synchronous>, transform_indices = @transform_5, window_bounds = array<i64: 128, 128>}, {pipeline_mode = #tpu.pipeline_mode<synchronous>, transform_indices = @transform_6, window_bounds = array<i64: 1, 128>}, {transform_indices = @transform_7, window_bounds = array<i64: 2, 128>}]} {
    %c0 = arith.constant 0 : index
    %c0_0 = arith.constant 0 : index
    %0 = vector.load %arg1[%c0, %c0_0] : memref<2x2048xbf16, #tpu.memory_space<vmem>>, vector<2x2048xbf16>
    %c0_1 = arith.constant 0 : index
    %c0_2 = arith.constant 0 : index
    %1 = vector.load %arg2[%c0_1, %c0_2] : memref<2048x128xbf16, #tpu.memory_space<vmem>>, vector<2048x128xbf16>
    %cst = arith.constant dense<0.000000e+00> : vector<2x128xf32>
    %2 = tpu.matmul %0, %1, %cst {dimension_numbers = #tpu.dot_dimension_numbers<[1], [0], [0], [1], [0, 0, 1, 1], [], []>} : vector<2x2048xbf16>, vector<2048x128xbf16>, vector<2x128xf32> -> vector<2x128xf32>
    %c0_3 = arith.constant 0 : index
    %c0_4 = arith.constant 0 : index
    %3 = vector.load %arg3[%c0_3, %c0_4] : memref<1x128xf32, #tpu.memory_space<vmem>>, vector<1x128xf32>
    %4 = vector.broadcast %3 : vector<1x128xf32> to vector<2x128xf32>
    %5 = arith.addf %2, %4 : vector<2x128xf32>
    %cst_5 = arith.constant 0.000000e+00 : f32
    %6 = vector.broadcast %cst_5 : f32 to vector<2x128xf32>
    %7 = arith.maximumf %5, %6 : vector<2x128xf32>
    %8 = arith.truncf %7 : vector<2x128xf32> to vector<2x128xbf16>
    %c0_6 = arith.constant 0 : index
    %c0_7 = arith.constant 0 : index
    %9 = vector.load %arg4[%c0_6, %c0_7] : memref<128x128xbf16, #tpu.memory_space<vmem>>, vector<128x128xbf16>
    %cst_8 = arith.constant dense<0.000000e+00> : vector<2x128xf32>
    %10 = tpu.matmul %8, %9, %cst_8 {dimension_numbers = #tpu.dot_dimension_numbers<[1], [0], [0], [1], [0, 0, 1, 1], [], []>} : vector<2x128xbf16>, vector<128x128xbf16>, vector<2x128xf32> -> vector<2x128xf32>
    %c0_9 = arith.constant 0 : index
    %c0_10 = arith.constant 0 : index
    %11 = vector.load %arg5[%c0_9, %c0_10] : memref<1x128xf32, #tpu.memory_space<vmem>>, vector<1x128xf32>
    %12 = vector.broadcast %11 : vector<1x128xf32> to vector<2x128xf32>
    %13 = arith.addf %10, %12 : vector<2x128xf32>
    %cst_11 = arith.constant 0.000000e+00 : f32
    %14 = vector.broadcast %cst_11 : f32 to vector<2x128xf32>
    %15 = arith.maximumf %13, %14 : vector<2x128xf32>
    %16 = arith.truncf %15 : vector<2x128xf32> to vector<2x128xbf16>
    %c0_12 = arith.constant 0 : index
    %c0_13 = arith.constant 0 : index
    %17 = vector.load %arg6[%c0_12, %c0_13] : memref<128x128xbf16, #tpu.memory_space<vmem>>, vector<128x128xbf16>
    %cst_14 = arith.constant dense<0.000000e+00> : vector<2x128xf32>
    %18 = tpu.matmul %16, %17, %cst_14 {dimension_numbers = #tpu.dot_dimension_numbers<[1], [0], [0], [1], [0, 0, 1, 1], [], []>} : vector<2x128xbf16>, vector<128x128xbf16>, vector<2x128xf32> -> vector<2x128xf32>
    %c0_15 = arith.constant 0 : index
    %c0_16 = arith.constant 0 : index
    %19 = vector.load %arg7[%c0_15, %c0_16] : memref<1x128xf32, #tpu.memory_space<vmem>>, vector<1x128xf32>
    %20 = vector.broadcast %19 : vector<1x128xf32> to vector<2x128xf32>
    %21 = arith.addf %18, %20 : vector<2x128xf32>
    %c0_17 = arith.constant 0 : index
    %c0_18 = arith.constant 0 : index
    %22 = vector.load %arg8[%c0_17, %c0_18] : memref<2x128xf32, #tpu.memory_space<vmem>>, vector<2x128xf32>
    tpu.vector_store %arg8[%c0_17, %c0_18], %21 {strides = array<i32>} : memref<2x128xf32, #tpu.memory_space<vmem>>, vector<2x128xf32>,
    return
  }
  func.func @transform_0(%arg0: i32) -> (i32, i32) {
    %c0_i32 = arith.constant 0 : i32
    %c0_i32_0 = arith.constant 0 : i32
    return %arg0, %c0_i32 : i32, i32
  }
  func.func @transform_1(%arg0: i32) -> (i32, i32) {
    %c0_i32 = arith.constant 0 : i32
    %c0_i32_0 = arith.constant 0 : i32
    %c0_i32_1 = arith.constant 0 : i32
    return %c0_i32, %c0_i32_0 : i32, i32
  }
  func.func @transform_2(%arg0: i32) -> (i32, i32) {
    %c0_i32 = arith.constant 0 : i32
    %c0_i32_0 = arith.constant 0 : i32
    %c0_i32_1 = arith.constant 0 : i32
    return %c0_i32, %c0_i32_0 : i32, i32
  }
  func.func @transform_3(%arg0: i32) -> (i32, i32) {
    %c0_i32 = arith.constant 0 : i32
    %c0_i32_0 = arith.constant 0 : i32
    %c0_i32_1 = arith.constant 0 : i32
    return %c0_i32, %c0_i32_0 : i32, i32
  }
  func.func @transform_4(%arg0: i32) -> (i32, i32) {
    %c0_i32 = arith.constant 0 : i32
    %c0_i32_0 = arith.constant 0 : i32
    %c0_i32_1 = arith.constant 0 : i32
    return %c0_i32, %c0_i32_0 : i32, i32
  }
  func.func @transform_5(%arg0: i32) -> (i32, i32) {
    %c0_i32 = arith.constant 0 : i32
    %c0_i32_0 = arith.constant 0 : i32
    %c0_i32_1 = arith.constant 0 : i32
    return %c0_i32, %c0_i32_0 : i32, i32
  }
  func.func @transform_6(%arg0: i32) -> (i32, i32) {
    %c0_i32 = arith.constant 0 : i32
    %c0_i32_0 = arith.constant 0 : i32
    %c0_i32_1 = arith.constant 0 : i32
    return %c0_i32, %c0_i32_0 : i32, i32
  }
  func.func @transform_7(%arg0: i32) -> (i32, i32) {
    %c0_i32 = arith.constant 0 : i32
    %c0_i32_0 = arith.constant 0 : i32
    return %arg0, %c0_i32 : i32, i32
  }
}

</mosaic_0001>

<llo_original>
// kernel: garment_classifier.3
$region0: #{garment_classifier.3}
  #allocation0 [shape = 'u32[]', space=smem, size = 0x4, offset = 0x4, fixed_abs, tag = 'smem constant byte address 0x4 - core index']
  #allocation1 [shape = 'u32[144,128]{1,0:T(1,128)}', space=vmem, size = 0x12000, scoped, tag = 'internal scratch']
  %s0 = inlined_call_operand.vmem [shape: bf16[288,100], index: 0, kind: input, shape index: {}]
  %s1 = inlined_call_operand.vmem [shape: bf16[100,512], index: 1, kind: input, shape index: {}]
  %s2 = inlined_call_operand.vmem [shape: f32[1,128], index: 2, kind: input, shape index: {}]
  %s3 = inlined_call_operand.vmem [shape: bf16[288,8], index: 3, kind: output, shape index: {}]
  %s4 = sld [smem:[#allocation0]]
  $region45: #{garment_classifier.3} parent=0
    _
  %s6 = ssub.s32 1, %s4
  %s7 = scalar_select 0, %s6, %s4
  loop: start=0, step=1, limit=4
  $region2: #{garment_classifier.3} parent=0 // loop_pre_header
    _
  $region3: #{garment_classifier.3} parent=0 // loop_header
    %s9 = sphi 0, %s13
    %p10 = scmp.ge.s32.totalorder %s9, 4
    %s19 = sphi 0, %s21
    %s22 = sphi 0, %s19
    %s23 = sphi 0, %s22
    %s39 = sphi 0, %s23
    %s43 = sphi 0, %s43
    %s45 = sphi 0, %s43
    %s46 = sphi 0, %s45
    %s60 = sphi 0, %s46
    %s64 = sphi 0, %s64
    %s66 = sphi 0, %s64
    %s67 = sphi 0, %s66
    %s81 = sphi 0, %s67
    %s87 = sphi 0, %s89
    %s90 = sphi 0, %s87
    %s91 = sphi 0, %s90
    %s107 = sphi 0, %s91
  $region4: #{garment_classifier.3} parent=0 // loop_header_branch
    %12 = sbr.rel (%p10) target = $region8
  $region5: #{garment_classifier.3} parent=0 // loop_body
    %s14 = ssub.s32 %s9, 1
    %s15 = ssub.s32 %s9, 2
    %s16 = sadd.s32 %s9, 1
    %s17 = ssub.s32 %s9, %s16
    %p18 = scmp.eq.s32.totalorder %s17, 0
    %s20 = sadd.s32 %s19, 1
    %s21 = scalar_select %p18, %s19, %s20
    %p24 = pneg %p18
    %p25 = scmp.eq.s32.totalorder %s9, 1
    %p26 = por %p24, %p25
    %p27 = scmp.ne.s32.totalorder %s19, %s22
    %p28 = scmp.eq.s32.totalorder %s9, 0
    %p29 = por %p27, %p28
    %p30 = scmp.ne.s32.totalorder %s19, %s22
    %p31 = scmp.eq.s32.totalorder %s14, 1
    %p32 = por %p30, %p31
    %p33 = scmp.ne.s32.totalorder %s22, %s23
    %p34 = scmp.eq.s32.totalorder %s14, 0
    %p35 = por %p33, %p34
    %p36 = scmp.ne.s32.totalorder %s22, %s23
    %p37 = scmp.eq.s32.totalorder %s15, 1
    %p38 = por %p36, %p37
    %p40 = scmp.ne.s32.totalorder %s23, %s39
    %p41 = scmp.eq.s32.totalorder %s15, 0
    %p42 = por %p40, %p41
    %s44 = sadd.s32 %s43, 1
    %p47 = scmp.eq.s32.totalorder %s9, 1
    %p48 = scmp.ne.s32.totalorder %s43, %s45
    %p49 = scmp.eq.s32.totalorder %s9, 0
    %p50 = por %p48, %p49
    %p51 = scmp.ne.s32.totalorder %s43, %s45
    %p52 = scmp.eq.s32.totalorder %s14, 1
    %p53 = por %p51, %p52
    %p54 = scmp.ne.s32.totalorder %s45, %s46
    %p55 = scmp.eq.s32.totalorder %s14, 0
    %p56 = por %p54, %p55
    %p57 = scmp.ne.s32.totalorder %s45, %s46
    %p58 = scmp.eq.s32.totalorder %s15, 1
    %p59 = por %p57, %p58
    %p61 = scmp.ne.s32.totalorder %s46, %s60
    %p62 = scmp.eq.s32.totalorder %s15, 0
    %p63 = por %p61, %p62
    %s65 = sadd.s32 %s64, 1
    %p68 = scmp.eq.s32.totalorder %s9, 1
    %p69 = scmp.ne.s32.totalorder %s64, %s66
    %p70 = scmp.eq.s32.totalorder %s9, 0
    %p71 = por %p69, %p70
    %p72 = scmp.ne.s32.totalorder %s64, %s66
    %p73 = scmp.eq.s32.totalorder %s14, 1
    %p74 = por %p72, %p73
    %p75 = scmp.ne.s32.totalorder %s66, %s67
    %p76 = scmp.eq.s32.totalorder %s14, 0
    %p77 = por %p75, %p76
    %p78 = scmp.ne.s32.totalorder %s66, %s67
    %p79 = scmp.eq.s32.totalorder %s15, 1
    %p80 = por %p78, %p79
    %p82 = scmp.ne.s32.totalorder %s67, %s81
    %p83 = scmp.eq.s32.totalorder %s15, 0
    %p84 = por %p82, %p83
    %s85 = ssub.s32 %s9, %s16
    %p86 = scmp.eq.s32.totalorder %s85, 0
    %s88 = sadd.s32 %s87, 1
    %s89 = scalar_select %p86, %s87, %s88
    %p92 = pneg %p86
    %p93 = scmp.eq.s32.totalorder %s9, 1
    %p94 = por %p92, %p93
    %p95 = scmp.ne.s32.totalorder %s87, %s90
    %p96 = scmp.eq.s32.totalorder %s9, 0
    %p97 = por %p95, %p96
    %p98 = scmp.ne.s32.totalorder %s87, %s90
    %p99 = scmp.eq.s32.totalorder %s14, 1
    %p100 = por %p98, %p99
    %p101 = scmp.ne.s32.totalorder %s90, %s91
    %p102 = scmp.eq.s32.totalorder %s14, 0
    %p103 = por %p101, %p102
    %p104 = scmp.ne.s32.totalorder %s90, %s91
    %p105 = scmp.eq.s32.totalorder %s15, 1
    %p106 = por %p104, %p105
    %p108 = scmp.ne.s32.totalorder %s91, %s107
    %p109 = scmp.eq.s32.totalorder %s15, 0
    %p110 = por %p108, %p109
    %p111 = scmp.le.s32.totalorder 1, %s9
    %p112 = scmp.lt.s32.totalorder %s9, 3
    %p113 = pnand %p111, %p112
    %p114 = pneg %p113
    // Predicated region
    $region9: #{garment_classifier.3} parent=5 // pred_check
      _
    $region10: #{garment_classifier.3} parent=5 // pred_check_branch
      %116 = sbr.rel (%p113) target = $region12
    $region11: #{garment_classifier.3} parent=5 // pred_region
      %s117 = ssub.s32 %s9, 1
      // Predicated region
      $region13: #{garment_classifier.3} parent=11 // pred_check
        %p118 = pneg %p56
      $region14: #{garment_classifier.3} parent=11 // pred_check_branch
        %120 = sbr.rel (%p118) target = $region16
      $region15: #{garment_classifier.3} parent=11 // pred_region
        _
      $region16: #{garment_classifier.3} parent=11 // pred_fallthru
        _
      // Predicated region
      $region17: #{garment_classifier.3} parent=11 // pred_check
        %p121 = pneg %p77
      $region18: #{garment_classifier.3} parent=11 // pred_check_branch
        %123 = sbr.rel (%p121) target = $region20
      $region19: #{garment_classifier.3} parent=11 // pred_region
        _
      $region20: #{garment_classifier.3} parent=11 // pred_fallthru
        _
    $region12: #{garment_classifier.3} parent=5 // pred_fallthru
      _
    %p124 = scmp.lt.s32.totalorder %s9, 2
    // Predicated region
    $region21: #{garment_classifier.3} parent=5 // pred_check
      %p125 = pneg %p124
    $region22: #{garment_classifier.3} parent=5 // pred_check_branch
      %127 = sbr.rel (%p125) target = $region24
    $region23: #{garment_classifier.3} parent=5 // pred_region
      // Predicated region
      $region25: #{garment_classifier.3} parent=23 // pred_check
        %p128 = pneg %p29
      $region26: #{garment_classifier.3} parent=23 // pred_check_branch
        %130 = sbr.rel (%p128) target = $region28
      $region27: #{garment_classifier.3} parent=23 // pred_region
        %s131 = smul.u32 18, %s9
        %p132 = scmp.lt.s32.totalorder %s131, 35
        %s133 = scalar_select %p132, %s131, 35
        %s134 = smul.addr %s133, 4
        %s135 = scalar_lea.vmem %s0, %s134
        %s136 = smul.u32 18, %s9
      $region28: #{garment_classifier.3} parent=23 // pred_fallthru
        _
    $region24: #{garment_classifier.3} parent=5 // pred_fallthru
      _
    %p137 = scmp.le.s32.totalorder 1, %s9
    %p138 = scmp.lt.s32.totalorder %s9, 3
    %p139 = pnand %p137, %p138
    %p140 = pneg %p139
    // Predicated region
    $region29: #{garment_classifier.3} parent=5 // pred_check
      _
    $region30: #{garment_classifier.3} parent=5 // pred_check_branch
      %142 = sbr.rel (%p139) target = $region32
    $region31: #{garment_classifier.3} parent=5 // pred_region
      %s143 = ssub.s32 %s9, 1
      %s144 = smul.u32 18, %s14
      %p145 = scmp.lt.s32.totalorder %s144, 35
      %s146 = scalar_select %p145, %s144, 35
      %s147 = smul.addr %s146, 4
      %s148 = scalar_lea.vmem %s0, %s147
      %p149 = pneg %p35
      %p150 = pneg %p32
      %p151 = pneg %p56
      %p152 = pneg %p53
      %p153 = pneg %p77
      %p154 = pneg %p74
      %p155 = pneg %p103
      %p156 = pneg %p100
      %s157 = smul.u32 18, %s14
      %p158 = scmp.lt.s32.totalorder %s157, 35
      %s159 = scalar_select %p158, %s157, 35
      %s160 = smul.addr %s159, 4
      %s161 = scalar_lea.vmem %s3, %s160
      %s162 = smul.u32 18, %s14
      %p163 = scmp.lt.s32.totalorder %s162, 35
      %s164 = scalar_select %p163, %s162, 35
      %s165 = smul.addr %s164, 4
      %s166 = scalar_lea.vmem %s0, %s165
      %s167 = smul.u32 18, %s14
      %s168 = smul.u32 18, %s14
      %p169 = scmp.lt.s32.totalorder %s168, 35
      %s170 = scalar_select %p169, %s168, 35
      %s171 = smul.addr %s170, 4
      %s172 = scalar_lea.vmem %s3, %s171
      %s173 = smul.u32 18, %s14
      %v175 = vld [vmem:[%s166] sm:$0xf]
      %v176 = vld [vmem:[%s166 + $0x4] sm:$0xf]
      %v177 = vld [vmem:[%s166 + $0x8] sm:$0xf]
      %v178 = vld [vmem:[%s166 + $0xc] sm:$0xf]
      %v179 = vld [vmem:[%s166 + $0x10] sm:$0xf]
      %v180 = vld [vmem:[%s166 + $0x14] sm:$0xf]
      %v181 = vld [vmem:[%s166 + $0x18] sm:$0xf]
      %v182 = vld [vmem:[%s166 + $0x1c] sm:$0xf]
      %v183 = vld [vmem:[%s166 + $0x20] sm:$0xf]
      %v184 = vld [vmem:[%s166 + $0x24] sm:$0xf]
      %v185 = vld [vmem:[%s166 + $0x28] sm:$0xf]
      %v186 = vld [vmem:[%s166 + $0x2c] sm:$0xf]
      %v187 = vld [vmem:[%s166 + $0x30] sm:$0xf]
      %v188 = vld [vmem:[%s166 + $0x34] sm:$0xf]
      %v189 = vld [vmem:[%s166 + $0x38] sm:$0xf]
      %v190 = vld [vmem:[%s166 + $0x3c] sm:$0xf]
      %v191 = vld [vmem:[%s166 + $0x40] sm:$0xf]
      %v192 = vld [vmem:[%s166 + $0x44] sm:$0xf]
      %v193 = vld [vmem:[%s1] sm:$0xff]
      %v194 = vld [vmem:[%s1 + $0x8] sm:$0xff]
      %v195 = vld [vmem:[%s1 + $0x10] sm:$0xff]
      %v196 = vld [vmem:[%s1 + $0x18] sm:$0xff]
      %v197 = vld [vmem:[%s1 + $0x20] sm:$0xff]
      %v198 = vld [vmem:[%s1 + $0x28] sm:$0xff]
      %v199 = vld [vmem:[%s1 + $0x30] sm:$0xff]
      %v200 = vld [vmem:[%s1 + $0x38] sm:$0xff]
      %v201 = vld [vmem:[%s1 + $0x40] sm:$0xff]
      %v202 = vld [vmem:[%s1 + $0x48] sm:$0xff]
      %v203 = vld [vmem:[%s1 + $0x50] sm:$0xff]
      %v204 = vld [vmem:[%s1 + $0x58] sm:$0xff]
      %v205 = vld [vmem:[%s1 + $0x60] sm:$0xff]
      %v206 = vld [vmem:[%s1 + $0x68] sm:$0xff]
      %v207 = vld [vmem:[%s1 + $0x70] sm:$0xff]
      %v208 = vld [vmem:[%s1 + $0x78] sm:$0xff]
      %v209 = vld [vmem:[%s1 + $0x80] sm:$0xff]
      %v210 = vld [vmem:[%s1 + $0x88] sm:$0xff]
      %v211 = vld [vmem:[%s1 + $0x90] sm:$0xff]
      %v212 = vld [vmem:[%s1 + $0x98] sm:$0xff]
      %v213 = vld [vmem:[%s1 + $0xa0] sm:$0xff]
      %v214 = vld [vmem:[%s1 + $0xa8] sm:$0xff]
      %v215 = vld [vmem:[%s1 + $0xb0] sm:$0xff]
      %v216 = vld [vmem:[%s1 + $0xb8] sm:$0xff]
      %v217 = vld [vmem:[%s1 + $0xc0] sm:$0x33]
      %v218 = vld [vmem:[%s1 + $0xc8] sm:$0x33]
      %v237 = vunpack.c.l.b16 %v175
      %v238 = vunpack.c.l.b16 %v176
      %v239 = vunpack.c.l.b16 %v177
      %v240 = vunpack.c.l.b16 %v178
      %v241 = vunpack.c.l.b16 %v179
      %v242 = vunpack.c.l.b16 %v180
      %v243 = vunpack.c.l.b16 %v181
      %v244 = vunpack.c.l.b16 %v182
      %v245 = vunpack.c.l.b16 %v183
      %v246 = vunpack.c.l.b16 %v184
      %v247 = vunpack.c.l.b16 %v185
      %v248 = vunpack.c.l.b16 %v186
      %v249 = vunpack.c.l.b16 %v187
      %v250 = vunpack.c.l.b16 %v188
      %v251 = vunpack.c.l.b16 %v189
      %v252 = vunpack.c.l.b16 %v190
      %v253 = vunpack.c.l.b16 %v191
      %v254 = vunpack.c.l.b16 %v192
      %v255 = vpack.c.b16 %v238, %v237
      %v256 = vpack.c.b16 %v240, %v239
      %v257 = vpack.c.b16 %v242, %v241
      %v258 = vpack.c.b16 %v244, %v243
      %v259 = vpack.c.b16 %v246, %v245
      %v260 = vpack.c.b16 %v248, %v247
      %v261 = vpack.c.b16 %v250, %v249
      %v262 = vpack.c.b16 %v252, %v251
      %v263 = vpack.c.b16 %v254, %v253
      %v290 = vunpack.c.l.b16 %v193
      %v291 = vunpack.c.h.b16 %v193
      %v292 = vunpack.c.l.b16 %v194
      %v293 = vunpack.c.h.b16 %v194
      %v294 = vunpack.c.l.b16 %v195
      %v295 = vunpack.c.h.b16 %v195
      %v296 = vunpack.c.l.b16 %v196
      %v297 = vunpack.c.h.b16 %v196
      %v298 = vunpack.c.l.b16 %v197
      %v299 = vunpack.c.h.b16 %v197
      %v300 = vunpack.c.l.b16 %v198
      %v301 = vunpack.c.h.b16 %v198
      %v302 = vunpack.c.l.b16 %v199
      %v303 = vunpack.c.h.b16 %v199
      %v304 = vunpack.c.l.b16 %v200
      %v305 = vunpack.c.h.b16 %v200
      %v306 = vunpack.c.l.b16 %v201
      %v307 = vunpack.c.h.b16 %v201
      %v308 = vunpack.c.l.b16 %v202
      %v309 = vunpack.c.h.b16 %v202
      %v310 = vunpack.c.l.b16 %v203
      %v311 = vunpack.c.h.b16 %v203
      %v312 = vunpack.c.l.b16 %v204
      %v313 = vunpack.c.h.b16 %v204
      %v314 = vunpack.c.l.b16 %v205
      %v315 = vunpack.c.h.b16 %v205
      %v316 = vunpack.c.l.b16 %v206
      %v317 = vunpack.c.h.b16 %v206
      %v318 = vunpack.c.l.b16 %v207
      %v319 = vunpack.c.h.b16 %v207
      %v320 = vunpack.c.l.b16 %v208
      %v321 = vunpack.c.h.b16 %v208
      %v322 = vunpack.c.l.b16 %v209
      %v323 = vunpack.c.h.b16 %v209
      %v324 = vunpack.c.l.b16 %v210
      %v325 = vunpack.c.h.b16 %v210
      %v326 = vunpack.c.l.b16 %v211
      %v327 = vunpack.c.h.b16 %v211
      %v328 = vunpack.c.l.b16 %v212
      %v329 = vunpack.c.h.b16 %v212
      %v330 = vunpack.c.l.b16 %v213
      %v331 = vunpack.c.h.b16 %v213
      %v332 = vunpack.c.l.b16 %v214
      %v333 = vunpack.c.h.b16 %v214
      %v334 = vunpack.c.l.b16 %v215
      %v335 = vunpack.c.h.b16 %v215
      %v336 = vunpack.c.l.b16 %v216
      %v337 = vunpack.c.h.b16 %v216
      %v338 = vunpack.c.l.b16 %v217
      %v339 = vunpack.c.h.b16 %v217
      %v340 = vunpack.c.l.b16 %v218
      %v341 = vunpack.c.h.b16 %v218
      %v342 = vpack.c.b16 %v294, %v290
      %v343 = vpack.c.b16 %v295, %v291
      %v344 = vpack.c.b16 %v296, %v292
      %v345 = vpack.c.b16 %v297, %v293
      %v346 = vpack.c.b16 %v302, %v298
      %v347 = vpack.c.b16 %v303, %v299
      %v348 = vpack.c.b16 %v304, %v300
      %v349 = vpack.c.b16 %v305, %v301
      %v350 = vpack.c.b16 %v310, %v306
      %v351 = vpack.c.b16 %v311, %v307
      %v352 = vpack.c.b16 %v312, %v308
      %v353 = vpack.c.b16 %v313, %v309
      %v354 = vpack.c.b16 %v318, %v314
      %v355 = vpack.c.b16 %v319, %v315
      %v356 = vpack.c.b16 %v320, %v316
      %v357 = vpack.c.b16 %v321, %v317
      %v358 = vpack.c.b16 %v326, %v322
      %v359 = vpack.c.b16 %v327, %v323
      %v360 = vpack.c.b16 %v328, %v324
      %v361 = vpack.c.b16 %v329, %v325
      %v362 = vpack.c.b16 %v334, %v330
      %v363 = vpack.c.b16 %v335, %v331
      %v364 = vpack.c.b16 %v336, %v332
      %v365 = vpack.c.b16 %v337, %v333
      %v366 = vpack.c.b16 %v338, %v338
      %v367 = vpack.c.b16 %v339, %v339
      %v368 = vpack.c.b16 %v340, %v340
      %v369 = vpack.c.b16 %v341, %v341
      %vm394 = vcmask 818176
      %v396 = vsel %vm394, %v255, 0
      %v399 = vsel %vm394, %v256, 0
      %v402 = vsel %vm394, %v257, 0
      %v405 = vsel %vm394, %v258, 0
      %v408 = vsel %vm394, %v259, 0
      %v411 = vsel %vm394, %v260, 0
      %v414 = vsel %vm394, %v261, 0
      %v417 = vsel %vm394, %v262, 0
      %v420 = vsel %vm394, %v263, 0
      %vm422 = vcmask 1041408
      %v424 = vsel %vm422, %v366, 0
      %v427 = vsel %vm422, %v367, 0
      %v430 = vsel %vm422, %v368, 0
      %v433 = vsel %vm422, %v369, 0
      %435 = vmatprep.subr.bf16.mxu0 0
      %436 = vmatpush1.bf16.msra.mxu0 0
      %437 = vmatprep.subr.bf16.mxu0 %v427
      %438 = vmatpush1.bf16.msra.mxu0 %v424
      %439 = vmatprep.subr.bf16.mxu0 %v363
      %440 = vmatpush1.bf16.msra.mxu0 %v362
      %441 = vmatprep.subr.bf16.mxu0 %v359
      %442 = vmatpush1.bf16.msra.mxu0 %v358
      %443 = vmatprep.subr.bf16.mxu0 %v355
      %444 = vmatpush1.bf16.msra.mxu0 %v354
      %445 = vmatprep.subr.bf16.mxu0 %v351
      %446 = vmatpush1.bf16.msra.mxu0 %v350
      %447 = vmatprep.subr.bf16.mxu0 %v347
      %448 = vmatpush1.bf16.msra.mxu0 %v346
      %449 = vmatprep.subr.bf16.mxu0 %v343
      %450 = vmatpush1.bf16.msra.mxu0 %v342
      %451 = vmatprep.subr.bf16.mxu0 0
      %452 = vmatpush2.bf16.msra.mxu0 0
      %453 = vmatprep.subr.bf16.mxu0 0
      %454 = vmatpush2.bf16.msra.mxu0 0
      %455 = vmatprep.subr.bf16.mxu0 0
      %456 = vmatpush2.bf16.msra.mxu0 0
      %457 = vmatprep.subr.bf16.mxu0 0
      %458 = vmatpush2.bf16.msra.mxu0 0
      %459 = vmatprep.subr.bf16.mxu0 0
      %460 = vmatpush2.bf16.msra.mxu0 0
      %461 = vmatprep.subr.bf16.mxu0 0
      %462 = vmatpush2.bf16.msra.mxu0 0
      %463 = vmatprep.subr.bf16.mxu0 0
      %464 = vmatpush2.bf16.msra.mxu0 0
      %465 = vmatprep.subr.bf16.mxu0 0
      %466 = vmatpush2.bf16.msra.mxu0 0
      %467 = vmatprep.mubr.bf16.mxu0 0
      %468 = vmatmul.mubr.bf16.gmra.mxu0 %v396
      %v469 = vpop.f32.mrf.mxu0
      %v470 = vadd.f32 0.0, %v469
      %v471 = vpop.f32.mrf.mxu0
      %v472 = vadd.f32 0.0, %v471
      %v473 = vpop.f32.mrf.mxu0
      %v474 = vadd.f32 0.0, %v473
      %v475 = vpop.f32.mrf.mxu0
      %v476 = vadd.f32 0.0, %v475
      %477 = vmatprep.mubr.bf16.mxu0 0
      %478 = vmatmul.mubr.bf16.gmra.mxu0 %v399
      %v479 = vpop.f32.mrf.mxu0
      %v480 = vadd.f32 0.0, %v479
      %v481 = vpop.f32.mrf.mxu0
      %v482 = vadd.f32 0.0, %v481
      %v483 = vpop.f32.mrf.mxu0
      %v484 = vadd.f32 0.0, %v483
      %v485 = vpop.f32.mrf.mxu0
      %v486 = vadd.f32 0.0, %v485
      %487 = vmatprep.mubr.bf16.mxu0 0
      %488 = vmatmul.mubr.bf16.gmra.mxu0 %v402
      %v489 = vpop.f32.mrf.mxu0
      %v490 = vadd.f32 0.0, %v489
      %v491 = vpop.f32.mrf.mxu0
      %v492 = vadd.f32 0.0, %v491
      %v493 = vpop.f32.mrf.mxu0
      %v494 = vadd.f32 0.0, %v493
      %v495 = vpop.f32.mrf.mxu0
      %v496 = vadd.f32 0.0, %v495
      %497 = vmatprep.mubr.bf16.mxu0 0
      %498 = vmatmul.mubr.bf16.gmra.mxu0 %v405
      %v499 = vpop.f32.mrf.mxu0
      %v500 = vadd.f32 0.0, %v499
      %v501 = vpop.f32.mrf.mxu0
      %v502 = vadd.f32 0.0, %v501
      %v503 = vpop.f32.mrf.mxu0
      %v504 = vadd.f32 0.0, %v503
      %v505 = vpop.f32.mrf.mxu0
      %v506 = vadd.f32 0.0, %v505
      %507 = vmatprep.mubr.bf16.mxu0 0
      %508 = vmatmul.mubr.bf16.gmra.mxu0 %v408
      %v509 = vpop.f32.mrf.mxu0
      %v510 = vadd.f32 0.0, %v509
      %v511 = vpop.f32.mrf.mxu0
      %v512 = vadd.f32 0.0, %v511
      %v513 = vpop.f32.mrf.mxu0
      %v514 = vadd.f32 0.0, %v513
      %v515 = vpop.f32.mrf.mxu0
      %v516 = vadd.f32 0.0, %v515
      %517 = vmatprep.mubr.bf16.mxu0 0
      %518 = vmatmul.mubr.bf16.gmra.mxu0 %v411
      %v519 = vpop.f32.mrf.mxu0
      %v520 = vadd.f32 0.0, %v519
      %v521 = vpop.f32.mrf.mxu0
      %v522 = vadd.f32 0.0, %v521
      %v523 = vpop.f32.mrf.mxu0
      %v524 = vadd.f32 0.0, %v523
      %v525 = vpop.f32.mrf.mxu0
      %v526 = vadd.f32 0.0, %v525
      %527 = vmatprep.mubr.bf16.mxu0 0
      %528 = vmatmul.mubr.bf16.gmra.mxu0 %v414
      %v529 = vpop.f32.mrf.mxu0
      %v530 = vadd.f32 0.0, %v529
      %v531 = vpop.f32.mrf.mxu0
      %v532 = vadd.f32 0.0, %v531
      %v533 = vpop.f32.mrf.mxu0
      %v534 = vadd.f32 0.0, %v533
      %v535 = vpop.f32.mrf.mxu0
      %v536 = vadd.f32 0.0, %v535
      %537 = vmatprep.mubr.bf16.mxu0 0
      %538 = vmatmul.mubr.bf16.gmra.mxu0 %v417
      %v539 = vpop.f32.mrf.mxu0
      %v540 = vadd.f32 0.0, %v539
      %v541 = vpop.f32.mrf.mxu0
      %v542 = vadd.f32 0.0, %v541
      %v543 = vpop.f32.mrf.mxu0
      %v544 = vadd.f32 0.0, %v543
      %v545 = vpop.f32.mrf.mxu0
      %v546 = vadd.f32 0.0, %v545
      %547 = vmatprep.mubr.bf16.mxu0 0
      %548 = vmatmul.mubr.bf16.gmra.mxu0 %v420
      %v549 = vpop.f32.mrf.mxu0
      %v550 = vadd.f32 0.0, %v549
      %v551 = vpop.f32.mrf.mxu0
      %v552 = vadd.f32 0.0, %v551
      %v553 = vpop.f32.mrf.mxu0
      %v554 = vadd.f32 0.0, %v553
      %v555 = vpop.f32.mrf.mxu0
      %v556 = vadd.f32 0.0, %v555
      %557 = vdwg.mxu0
      %558 = vmatprep.subr.bf16.mxu0 0
      %559 = vmatpush1.bf16.msra.mxu0 0
      %560 = vmatprep.subr.bf16.mxu0 %v433
      %561 = vmatpush1.bf16.msra.mxu0 %v430
      %562 = vmatprep.subr.bf16.mxu0 %v365
      %563 = vmatpush1.bf16.msra.mxu0 %v364
      %564 = vmatprep.subr.bf16.mxu0 %v361
      %565 = vmatpush1.bf16.msra.mxu0 %v360
      %566 = vmatprep.subr.bf16.mxu0 %v357
      %567 = vmatpush1.bf16.msra.mxu0 %v356
      %568 = vmatprep.subr.bf16.mxu0 %v353
      %569 = vmatpush1.bf16.msra.mxu0 %v352
      %570 = vmatprep.subr.bf16.mxu0 %v349
      %571 = vmatpush1.bf16.msra.mxu0 %v348
      %572 = vmatprep.subr.bf16.mxu0 %v345
      %573 = vmatpush1.bf16.msra.mxu0 %v344
      %574 = vmatprep.subr.bf16.mxu0 0
      %575 = vmatpush2.bf16.msra.mxu0 0
      %576 = vmatprep.subr.bf16.mxu0 0
      %577 = vmatpush2.bf16.msra.mxu0 0
      %578 = vmatprep.subr.bf16.mxu0 0
      %579 = vmatpush2.bf16.msra.mxu0 0
      %580 = vmatprep.subr.bf16.mxu0 0
      %581 = vmatpush2.bf16.msra.mxu0 0
      %582 = vmatprep.subr.bf16.mxu0 0
      %583 = vmatpush2.bf16.msra.mxu0 0
      %584 = vmatprep.subr.bf16.mxu0 0
      %585 = vmatpush2.bf16.msra.mxu0 0
      %586 = vmatprep.subr.bf16.mxu0 0
      %587 = vmatpush2.bf16.msra.mxu0 0
      %588 = vmatprep.subr.bf16.mxu0 0
      %589 = vmatpush2.bf16.msra.mxu0 0
      %590 = vmatprep.mubr.bf16.mxu0 0
      %591 = vmatmul.mubr.bf16.gmra.mxu0 %v396
      %v592 = vpop.f32.mrf.mxu0
      %v593 = vadd.f32 0.0, %v592
      %v594 = vpop.f32.mrf.mxu0
      %v595 = vadd.f32 0.0, %v594
      %v596 = vpop.f32.mrf.mxu0
      %v597 = vadd.f32 0.0, %v596
      %v598 = vpop.f32.mrf.mxu0
      %v599 = vadd.f32 0.0, %v598
      %600 = vmatprep.mubr.bf16.mxu0 0
      %601 = vmatmul.mubr.bf16.gmra.mxu0 %v399
      %v602 = vpop.f32.mrf.mxu0
      %v603 = vadd.f32 0.0, %v602
      %v604 = vpop.f32.mrf.mxu0
      %v605 = vadd.f32 0.0, %v604
      %v606 = vpop.f32.mrf.mxu0
      %v607 = vadd.f32 0.0, %v606
      %v608 = vpop.f32.mrf.mxu0
      %v609 = vadd.f32 0.0, %v608
      %610 = vmatprep.mubr.bf16.mxu0 0
      %611 = vmatmul.mubr.bf16.gmra.mxu0 %v402
      %v612 = vpop.f32.mrf.mxu0
      %v613 = vadd.f32 0.0, %v612
      %v614 = vpop.f32.mrf.mxu0
      %v615 = vadd.f32 0.0, %v614
      %v616 = vpop.f32.mrf.mxu0
      %v617 = vadd.f32 0.0, %v616
      %v618 = vpop.f32.mrf.mxu0
      %v619 = vadd.f32 0.0, %v618
      %620 = vmatprep.mubr.bf16.mxu0 0
      %621 = vmatmul.mubr.bf16.gmra.mxu0 %v405
      %v622 = vpop.f32.mrf.mxu0
      %v623 = vadd.f32 0.0, %v622
      %v624 = vpop.f32.mrf.mxu0
      %v625 = vadd.f32 0.0, %v624
      %v626 = vpop.f32.mrf.mxu0
      %v627 = vadd.f32 0.0, %v626
      %v628 = vpop.f32.mrf.mxu0
      %v629 = vadd.f32 0.0, %v628
      %630 = vmatprep.mubr.bf16.mxu0 0
      %631 = vmatmul.mubr.bf16.gmra.mxu0 %v408
      %v632 = vpop.f32.mrf.mxu0
      %v633 = vadd.f32 0.0, %v632
      %v634 = vpop.f32.mrf.mxu0
      %v635 = vadd.f32 0.0, %v634
      %v636 = vpop.f32.mrf.mxu0
      %v637 = vadd.f32 0.0, %v636
      %v638 = vpop.f32.mrf.mxu0
      %v639 = vadd.f32 0.0, %v638
      %640 = vmatprep.mubr.bf16.mxu0 0
      %641 = vmatmul.mubr.bf16.gmra.mxu0 %v411
      %v642 = vpop.f32.mrf.mxu0
      %v643 = vadd.f32 0.0, %v642
      %v644 = vpop.f32.mrf.mxu0
      %v645 = vadd.f32 0.0, %v644
      %v646 = vpop.f32.mrf.mxu0
      %v647 = vadd.f32 0.0, %v646
      %v648 = vpop.f32.mrf.mxu0
      %v649 = vadd.f32 0.0, %v648
      %650 = vmatprep.mubr.bf16.mxu0 0
      %651 = vmatmul.mubr.bf16.gmra.mxu0 %v414
      %v652 = vpop.f32.mrf.mxu0
      %v653 = vadd.f32 0.0, %v652
      %v654 = vpop.f32.mrf.mxu0
      %v655 = vadd.f32 0.0, %v654
      %v656 = vpop.f32.mrf.mxu0
      %v657 = vadd.f32 0.0, %v656
      %v658 = vpop.f32.mrf.mxu0
      %v659 = vadd.f32 0.0, %v658
      %660 = vmatprep.mubr.bf16.mxu0 0
      %661 = vmatmul.mubr.bf16.gmra.mxu0 %v417
      %v662 = vpop.f32.mrf.mxu0
      %v663 = vadd.f32 0.0, %v662
      %v664 = vpop.f32.mrf.mxu0
      %v665 = vadd.f32 0.0, %v664
      %v666 = vpop.f32.mrf.mxu0
      %v667 = vadd.f32 0.0, %v666
      %v668 = vpop.f32.mrf.mxu0
      %v669 = vadd.f32 0.0, %v668
      %670 = vmatprep.mubr.bf16.mxu0 0
      %671 = vmatmul.mubr.bf16.gmra.mxu0 %v420
      %v672 = vpop.f32.mrf.mxu0
      %v673 = vadd.f32 0.0, %v672
      %v674 = vpop.f32.mrf.mxu0
      %v675 = vadd.f32 0.0, %v674
      %v676 = vpop.f32.mrf.mxu0
      %v677 = vadd.f32 0.0, %v676
      %v678 = vpop.f32.mrf.mxu0
      %v679 = vadd.f32 0.0, %v678
      %680 = vdwg.mxu0
      %v681 = vmax.f32 %v470, %v472
      %v682 = vmax.f32 %v474, %v476
      %v683 = vmax.f32 %v480, %v482
      %v684 = vmax.f32 %v484, %v486
      %v685 = vmax.f32 %v490, %v492
      %v686 = vmax.f32 %v494, %v496
      %v687 = vmax.f32 %v500, %v502
      %v688 = vmax.f32 %v504, %v506
      %v689 = vmax.f32 %v510, %v512
      %v690 = vmax.f32 %v514, %v516
      %v691 = vmax.f32 %v520, %v522
      %v692 = vmax.f32 %v524, %v526
      %v693 = vmax.f32 %v530, %v532
      %v694 = vmax.f32 %v534, %v536
      %v695 = vmax.f32 %v540, %v542
      %v696 = vmax.f32 %v544, %v546
      %v697 = vmax.f32 %v550, %v552
      %v698 = vmax.f32 %v554, %v556
      %v699 = vmax.f32 %v681, %v593
      %v700 = vmax.f32 %v682, %v597
      %v701 = vmax.f32 %v683, %v603
      %v702 = vmax.f32 %v684, %v607
      %v703 = vmax.f32 %v685, %v613
      %v704 = vmax.f32 %v686, %v617
      %v705 = vmax.f32 %v687, %v623
      %v706 = vmax.f32 %v688, %v627
      %v707 = vmax.f32 %v689, %v633
      %v708 = vmax.f32 %v690, %v637
      %v709 = vmax.f32 %v691, %v643
      %v710 = vmax.f32 %v692, %v647
      %v711 = vmax.f32 %v693, %v653
      %v712 = vmax.f32 %v694, %v657
      %v713 = vmax.f32 %v695, %v663
      %v714 = vmax.f32 %v696, %v667
      %v715 = vmax.f32 %v697, %v673
      %v716 = vmax.f32 %v698, %v677
      %v717 = vmax.f32 %v699, %v595
      %v718 = vmax.f32 %v700, %v599
      %v719 = vmax.f32 %v701, %v605
      %v720 = vmax.f32 %v702, %v609
      %v721 = vmax.f32 %v703, %v615
      %v722 = vmax.f32 %v704, %v619
      %v723 = vmax.f32 %v705, %v625
      %v724 = vmax.f32 %v706, %v629
      %v725 = vmax.f32 %v707, %v635
      %v726 = vmax.f32 %v708, %v639
      %v727 = vmax.f32 %v709, %v645
      %v728 = vmax.f32 %v710, %v649
      %v729 = vmax.f32 %v711, %v655
      %v730 = vmax.f32 %v712, %v659
      %v731 = vmax.f32 %v713, %v665
      %v732 = vmax.f32 %v714, %v669
      %v733 = vmax.f32 %v715, %v675
      %v734 = vmax.f32 %v716, %v679
      %v735 = vld [vmem:[%s2] sm:$0x1]
      %v737 = vlaneseq
      %v738 = vshrl.u32 %v737, 7
      %v739 = vsub.s32 0, %v738
      %v740 = vrot.slane %v735, %v739
      %v742 = vadd.f32 %v717, %v740
      %v743 = vadd.f32 %v718, %v740
      %v744 = vadd.f32 %v719, %v740
      %v745 = vadd.f32 %v720, %v740
      %v746 = vadd.f32 %v721, %v740
      %v747 = vadd.f32 %v722, %v740
      %v748 = vadd.f32 %v723, %v740
      %v749 = vadd.f32 %v724, %v740
      %v750 = vadd.f32 %v725, %v740
      %v751 = vadd.f32 %v726, %v740
      %v752 = vadd.f32 %v727, %v740
      %v753 = vadd.f32 %v728, %v740
      %v754 = vadd.f32 %v729, %v740
      %v755 = vadd.f32 %v730, %v740
      %v756 = vadd.f32 %v731, %v740
      %v757 = vadd.f32 %v732, %v740
      %v758 = vadd.f32 %v733, %v740
      %v759 = vadd.f32 %v734, %v740
      %v760 = vmax.f32 %v742, 0.0
      %v761 = vmax.f32 %v743, 0.0
      %v762 = vmax.f32 %v744, 0.0
      %v763 = vmax.f32 %v745, 0.0
      %v764 = vmax.f32 %v746, 0.0
      %v765 = vmax.f32 %v747, 0.0
      %v766 = vmax.f32 %v748, 0.0
      %v767 = vmax.f32 %v749, 0.0
      %v768 = vmax.f32 %v750, 0.0
      %v769 = vmax.f32 %v751, 0.0
      %v770 = vmax.f32 %v752, 0.0
      %v771 = vmax.f32 %v753, 0.0
      %v772 = vmax.f32 %v754, 0.0
      %v773 = vmax.f32 %v755, 0.0
      %v774 = vmax.f32 %v756, 0.0
      %v775 = vmax.f32 %v757, 0.0
      %v776 = vmax.f32 %v758, 0.0
      %v777 = vmax.f32 %v759, 0.0
      %v778 = vpack.c.bf16 %v761, %v760
      %v779 = vpack.c.bf16 %v763, %v762
      %v780 = vpack.c.bf16 %v765, %v764
      %v781 = vpack.c.bf16 %v767, %v766
      %v782 = vpack.c.bf16 %v769, %v768
      %v783 = vpack.c.bf16 %v771, %v770
      %v784 = vpack.c.bf16 %v773, %v772
      %v785 = vpack.c.bf16 %v775, %v774
      %v786 = vpack.c.bf16 %v777, %v776
      %v796 = vunpack.c.l.b16 %v778
      %v797 = vunpack.c.h.b16 %v778
      %v798 = vunpack.c.l.b16 %v779
      %v799 = vunpack.c.h.b16 %v779
      %v800 = vunpack.c.l.b16 %v780
      %v801 = vunpack.c.h.b16 %v780
      %v802 = vunpack.c.l.b16 %v781
      %v803 = vunpack.c.h.b16 %v781
      %v804 = vunpack.c.l.b16 %v782
      %v805 = vunpack.c.h.b16 %v782
      %v806 = vunpack.c.l.b16 %v783
      %v807 = vunpack.c.h.b16 %v783
      %v808 = vunpack.c.l.b16 %v784
      %v809 = vunpack.c.h.b16 %v784
      %v810 = vunpack.c.l.b16 %v785
      %v811 = vunpack.c.h.b16 %v785
      %v812 = vunpack.c.l.b16 %v786
      %v813 = vunpack.c.h.b16 %v786
      %v814 = vpack.c.b16 %v796, %v796
      %v815 = vpack.c.b16 %v797, %v797
      %v816 = vpack.c.b16 %v798, %v798
      %v817 = vpack.c.b16 %v799, %v799
      %v818 = vpack.c.b16 %v800, %v800
      %v819 = vpack.c.b16 %v801, %v801
      %v820 = vpack.c.b16 %v802, %v802
      %v821 = vpack.c.b16 %v803, %v803
      %v822 = vpack.c.b16 %v804, %v804
      %v823 = vpack.c.b16 %v805, %v805
      %v824 = vpack.c.b16 %v806, %v806
      %v825 = vpack.c.b16 %v807, %v807
      %v826 = vpack.c.b16 %v808, %v808
      %v827 = vpack.c.b16 %v809, %v809
      %v828 = vpack.c.b16 %v810, %v810
      %v829 = vpack.c.b16 %v811, %v811
      %v830 = vpack.c.b16 %v812, %v812
      %v831 = vpack.c.b16 %v813, %v813
      %vm850 = vcmask 60416
      %851 = vst.msk [vmem:[%s172] sm:$0xf] %vm850, %v814
      %852 = vst.msk [vmem:[%s172 + $0x4] sm:$0xf] %vm850, %v815
      %853 = vst.msk [vmem:[%s172 + $0x8] sm:$0xf] %vm850, %v816
      %854 = vst.msk [vmem:[%s172 + $0xc] sm:$0xf] %vm850, %v817
      %855 = vst.msk [vmem:[%s172 + $0x10] sm:$0xf] %vm850, %v818
      %856 = vst.msk [vmem:[%s172 + $0x14] sm:$0xf] %vm850, %v819
      %857 = vst.msk [vmem:[%s172 + $0x18] sm:$0xf] %vm850, %v820
      %858 = vst.msk [vmem:[%s172 + $0x1c] sm:$0xf] %vm850, %v821
      %859 = vst.msk [vmem:[%s172 + $0x20] sm:$0xf] %vm850, %v822
      %860 = vst.msk [vmem:[%s172 + $0x24] sm:$0xf] %vm850, %v823
      %861 = vst.msk [vmem:[%s172 + $0x28] sm:$0xf] %vm850, %v824
      %862 = vst.msk [vmem:[%s172 + $0x2c] sm:$0xf] %vm850, %v825
      %863 = vst.msk [vmem:[%s172 + $0x30] sm:$0xf] %vm850, %v826
      %864 = vst.msk [vmem:[%s172 + $0x34] sm:$0xf] %vm850, %v827
      %865 = vst.msk [vmem:[%s172 + $0x38] sm:$0xf] %vm850, %v828
      %866 = vst.msk [vmem:[%s172 + $0x3c] sm:$0xf] %vm850, %v829
      %867 = vst.msk [vmem:[%s172 + $0x40] sm:$0xf] %vm850, %v830
      %868 = vst.msk [vmem:[%s172 + $0x44] sm:$0xf] %vm850, %v831
      %s869 = smul.u32 18, %s14
      %p870 = scmp.lt.s32.totalorder %s869, 35
      %s871 = scalar_select %p870, %s869, 35
      %s872 = smul.addr %s871, 4
      %s873 = scalar_lea.vmem %s3, %s872
      // Predicated region
      $region33: #{garment_classifier.3} parent=31 // pred_check
        %p874 = pneg %p100
      $region34: #{garment_classifier.3} parent=31 // pred_check_branch
        %876 = sbr.rel (%p874) target = $region36
      $region35: #{garment_classifier.3} parent=31 // pred_region
        %s877 = smul.u32 18, %s14
      $region36: #{garment_classifier.3} parent=31 // pred_fallthru
        _
    $region32: #{garment_classifier.3} parent=5 // pred_fallthru
      _
    %p878 = scmp.le.s32.totalorder 2, %s9
    // Predicated region
    $region37: #{garment_classifier.3} parent=5 // pred_check
      %p879 = pneg %p878
    $region38: #{garment_classifier.3} parent=5 // pred_check_branch
      %881 = sbr.rel (%p879) target = $region40
    $region39: #{garment_classifier.3} parent=5 // pred_region
      %s882 = ssub.s32 %s9, 2
      // Predicated region
      $region41: #{garment_classifier.3} parent=39 // pred_check
        %p883 = pneg %p106
      $region42: #{garment_classifier.3} parent=39 // pred_check_branch
        %885 = sbr.rel (%p883) target = $region44
      $region43: #{garment_classifier.3} parent=39 // pred_region
        %s886 = smul.u32 18, %s15
        %p887 = scmp.lt.s32.totalorder %s886, 35
        %s888 = scalar_select %p887, %s886, 35
        %s889 = smul.addr %s888, 4
        %s890 = scalar_lea.vmem %s3, %s889
      $region44: #{garment_classifier.3} parent=39 // pred_fallthru
        _
    $region40: #{garment_classifier.3} parent=5 // pred_fallthru
      _
  $region6: #{garment_classifier.3} parent=0 // loop_footer
    %s13 = sadd.s32 1, %s9
  $region7: #{garment_classifier.3} parent=0 // loop_footer_branch
    %8 = sbr.rel target = $region3
  $region8: #{garment_classifier.3} parent=0 // loop_exit
    _

// kernel: garment_classifier.4
$region0: #{garment_classifier.4}
  #allocation0 [shape = 'u32[]', space=smem, size = 0x4, offset = 0x4, fixed_abs, tag = 'smem constant byte address 0x4 - core index']
  #allocation1 [shape = 'u32[144,128]{1,0:T(1,128)}', space=vmem, size = 0x12000, scoped, tag = 'internal scratch']
  %s0 = inlined_call_operand.vmem [shape: bf16[32,200], index: 0, kind: input, shape index: {}]
  %s1 = inlined_call_operand.vmem [shape: bf16[32,200], index: 1, kind: input, shape index: {}]
  %s2 = inlined_call_operand.vmem [shape: bf16[32,200], index: 2, kind: input, shape index: {}]
  %s3 = inlined_call_operand.vmem [shape: bf16[32,200], index: 3, kind: input, shape index: {}]
  %s4 = inlined_call_operand.vmem [shape: bf16[200,128], index: 4, kind: input, shape index: {}]
  %s5 = inlined_call_operand.vmem [shape: f32[1,128], index: 5, kind: input, shape index: {}]
  %s6 = inlined_call_operand.vmem [shape: bf16[32,128], index: 6, kind: output, shape index: {}]
  %s7 = sld [smem:[#allocation0]]
  $region34: #{garment_classifier.4} parent=0
    _
  %s9 = ssub.s32 1, %s7
  %s10 = scalar_select 0, %s9, %s7
  // Predicated region
  $region2: #{garment_classifier.4} parent=0 // pred_check
    _
  $region3: #{garment_classifier.4} parent=0 // pred_check_branch
    %12 = sbr.rel (0) target = $region5
  $region4: #{garment_classifier.4} parent=0 // pred_region
    _
  $region5: #{garment_classifier.4} parent=0 // pred_fallthru
    _
  // Predicated region
  $region6: #{garment_classifier.4} parent=0 // pred_check
    _
  $region7: #{garment_classifier.4} parent=0 // pred_check_branch
    %14 = sbr.rel (0) target = $region9
  $region8: #{garment_classifier.4} parent=0 // pred_region
    _
  $region9: #{garment_classifier.4} parent=0 // pred_fallthru
    _
  // Predicated region
  $region10: #{garment_classifier.4} parent=0 // pred_check
    _
  $region11: #{garment_classifier.4} parent=0 // pred_check_branch
    %16 = sbr.rel (0) target = $region13
  $region12: #{garment_classifier.4} parent=0 // pred_region
    _
  $region13: #{garment_classifier.4} parent=0 // pred_fallthru
    _
  // Predicated region
  $region14: #{garment_classifier.4} parent=0 // pred_check
    _
  $region15: #{garment_classifier.4} parent=0 // pred_check_branch
    %18 = sbr.rel (0) target = $region17
  $region16: #{garment_classifier.4} parent=0 // pred_region
    _
  $region17: #{garment_classifier.4} parent=0 // pred_fallthru
    _
  // Predicated region
  $region18: #{garment_classifier.4} parent=0 // pred_check
    _
  $region19: #{garment_classifier.4} parent=0 // pred_check_branch
    %20 = sbr.rel (0) target = $region21
  $region20: #{garment_classifier.4} parent=0 // pred_region
    _
  $region21: #{garment_classifier.4} parent=0 // pred_fallthru
    _
  // Predicated region
  $region22: #{garment_classifier.4} parent=0 // pred_check
    _
  $region23: #{garment_classifier.4} parent=0 // pred_check_branch
    %22 = sbr.rel (0) target = $region25
  $region24: #{garment_classifier.4} parent=0 // pred_region
    _
  $region25: #{garment_classifier.4} parent=0 // pred_fallthru
    _
  %v24 = vld [vmem:[%s4] sm:$0xf]
  %v25 = vld [vmem:[%s4 + $0x4] sm:$0xf]
  %v26 = vld [vmem:[%s4 + $0x8] sm:$0xf]
  %v27 = vld [vmem:[%s4 + $0xc] sm:$0xf]
  %v28 = vld [vmem:[%s4 + $0x10] sm:$0xf]
  %v29 = vld [vmem:[%s4 + $0x14] sm:$0xf]
  %v30 = vld [vmem:[%s4 + $0x18] sm:$0xf]
  %v31 = vld [vmem:[%s4 + $0x1c] sm:$0xf]
  %v32 = vld [vmem:[%s4 + $0x20] sm:$0xf]
  %v33 = vld [vmem:[%s4 + $0x24] sm:$0xf]
  %v34 = vld [vmem:[%s4 + $0x28] sm:$0xf]
  %v35 = vld [vmem:[%s4 + $0x2c] sm:$0xf]
  %v36 = vld [vmem:[%s4 + $0x30] sm:$0xf]
  %v37 = vld [vmem:[%s4 + $0x34] sm:$0xf]
  %v38 = vld [vmem:[%s4 + $0x38] sm:$0xf]
  %v39 = vld [vmem:[%s4 + $0x3c] sm:$0xf]
  %v40 = vld [vmem:[%s4 + $0x40] sm:$0xf]
  %v41 = vld [vmem:[%s4 + $0x44] sm:$0xf]
  %v42 = vld [vmem:[%s4 + $0x48] sm:$0xf]
  %v43 = vld [vmem:[%s4 + $0x4c] sm:$0xf]
  %v44 = vld [vmem:[%s4 + $0x50] sm:$0xf]
  %v45 = vld [vmem:[%s4 + $0x54] sm:$0xf]
  %v46 = vld [vmem:[%s4 + $0x58] sm:$0xf]
  %v47 = vld [vmem:[%s4 + $0x5c] sm:$0xf]
  %v48 = vld [vmem:[%s4 + $0x60] sm:$0xf]
  %v49 = vld [vmem:[%s0] sm:$0xff]
  %v50 = vld [vmem:[%s0 + $0x8] sm:$0xff]
  %v51 = vld [vmem:[%s0 + $0x10] sm:$0xff]
  %v52 = vld [vmem:[%s0 + $0x18] sm:$0xff]
  %v57 = vunpack.c.l.b16 %v49
  %v58 = vunpack.c.h.b16 %v49
  %v59 = vunpack.c.l.b16 %v50
  %v60 = vunpack.c.h.b16 %v50
  %v61 = vunpack.c.l.b16 %v51
  %v62 = vunpack.c.h.b16 %v51
  %v63 = vunpack.c.l.b16 %v52
  %v64 = vunpack.c.h.b16 %v52
  %v65 = vpack.c.b16 %v59, %v57
  %v66 = vpack.c.b16 %v60, %v58
  %v67 = vpack.c.b16 %v63, %v61
  %v68 = vpack.c.b16 %v64, %v62
  %v96 = vunpack.c.l.b16 %v24
  %v97 = vunpack.c.l.b16 %v25
  %v98 = vunpack.c.l.b16 %v26
  %v99 = vunpack.c.l.b16 %v27
  %v100 = vunpack.c.l.b16 %v28
  %v101 = vunpack.c.l.b16 %v29
  %v102 = vunpack.c.l.b16 %v30
  %v103 = vunpack.c.l.b16 %v31
  %v104 = vunpack.c.l.b16 %v32
  %v105 = vunpack.c.l.b16 %v33
  %v106 = vunpack.c.l.b16 %v34
  %v107 = vunpack.c.l.b16 %v35
  %v108 = vunpack.c.l.b16 %v36
  %v109 = vunpack.c.l.b16 %v37
  %v110 = vunpack.c.l.b16 %v38
  %v111 = vunpack.c.l.b16 %v39
  %v112 = vunpack.c.l.b16 %v40
  %v113 = vunpack.c.l.b16 %v41
  %v114 = vunpack.c.l.b16 %v42
  %v115 = vunpack.c.l.b16 %v43
  %v116 = vunpack.c.l.b16 %v44
  %v117 = vunpack.c.l.b16 %v45
  %v118 = vunpack.c.l.b16 %v46
  %v119 = vunpack.c.l.b16 %v47
  %v120 = vunpack.c.l.b16 %v48
  %v121 = vpack.c.b16 %v97, %v96
  %v122 = vpack.c.b16 %v99, %v98
  %v123 = vpack.c.b16 %v101, %v100
  %v124 = vpack.c.b16 %v103, %v102
  %v125 = vpack.c.b16 %v105, %v104
  %v126 = vpack.c.b16 %v107, %v106
  %v127 = vpack.c.b16 %v109, %v108
  %v128 = vpack.c.b16 %v111, %v110
  %v129 = vpack.c.b16 %v113, %v112
  %v130 = vpack.c.b16 %v115, %v114
  %v131 = vpack.c.b16 %v117, %v116
  %v132 = vpack.c.b16 %v119, %v118
  %v133 = vpack.c.b16 %v120, %v120
  %vm146 = vcmask 588800
  %v148 = vsel %vm146, %v66, 0
  %v151 = vsel %vm146, %v68, 0
  %vm153 = vcmask 1043456
  %v155 = vsel %vm153, %v133, 0
  %157 = vmatprep.subr.bf16.mxu0 0
  %158 = vmatpush1.bf16.msra.mxu0 %v128
  %159 = vmatprep.subr.bf16.mxu0 0
  %160 = vmatpush1.bf16.msra.mxu0 %v127
  %161 = vmatprep.subr.bf16.mxu0 0
  %162 = vmatpush1.bf16.msra.mxu0 %v126
  %163 = vmatprep.subr.bf16.mxu0 0
  %164 = vmatpush1.bf16.msra.mxu0 %v125
  %165 = vmatprep.subr.bf16.mxu0 0
  %166 = vmatpush1.bf16.msra.mxu0 %v124
  %167 = vmatprep.subr.bf16.mxu0 0
  %168 = vmatpush1.bf16.msra.mxu0 %v123
  %169 = vmatprep.subr.bf16.mxu0 0
  %170 = vmatpush1.bf16.msra.mxu0 %v122
  %171 = vmatprep.subr.bf16.mxu0 0
  %172 = vmatpush1.bf16.msra.mxu0 %v121
  %173 = vmatprep.subr.bf16.mxu0 0
  %174 = vmatpush2.bf16.msra.mxu0 0
  %175 = vmatprep.subr.bf16.mxu0 0
  %176 = vmatpush2.bf16.msra.mxu0 0
  %177 = vmatprep.subr.bf16.mxu0 0
  %178 = vmatpush2.bf16.msra.mxu0 0
  %179 = vmatprep.subr.bf16.mxu0 0
  %180 = vmatpush2.bf16.msra.mxu0 %v155
  %181 = vmatprep.subr.bf16.mxu0 0
  %182 = vmatpush2.bf16.msra.mxu0 %v132
  %183 = vmatprep.subr.bf16.mxu0 0
  %184 = vmatpush2.bf16.msra.mxu0 %v131
  %185 = vmatprep.subr.bf16.mxu0 0
  %186 = vmatpush2.bf16.msra.mxu0 %v130
  %187 = vmatprep.subr.bf16.mxu0 0
  %188 = vmatpush2.bf16.msra.mxu0 %v129
  %189 = vmatprep.mubr.bf16.mxu0 %v148
  %190 = vmatmul.mubr.bf16.gmra.mxu0 %v65
  %v191 = vpop.f32.mrf.mxu0
  %v192 = vadd.f32 0.0, %v191
  %v193 = vpop.f32.mrf.mxu0
  %v194 = vpop.f32.mrf.mxu0
  %v195 = vadd.f32 0.0, %v194
  %v196 = vpop.f32.mrf.mxu0
  %197 = vmatprep.mubr.bf16.mxu0 %v151
  %198 = vmatmul.mubr.bf16.gmra.mxu0 %v67
  %v199 = vpop.f32.mrf.mxu0
  %v200 = vadd.f32 0.0, %v199
  %v201 = vpop.f32.mrf.mxu0
  %v202 = vpop.f32.mrf.mxu0
  %v203 = vadd.f32 0.0, %v202
  %v204 = vpop.f32.mrf.mxu0
  %205 = vdwg.mxu0
  %v206 = vld [vmem:[%s1] sm:$0xff]
  %v207 = vld [vmem:[%s1 + $0x8] sm:$0xff]
  %v208 = vld [vmem:[%s1 + $0x10] sm:$0xff]
  %v209 = vld [vmem:[%s1 + $0x18] sm:$0xff]
  %v214 = vunpack.c.l.b16 %v206
  %v215 = vunpack.c.h.b16 %v206
  %v216 = vunpack.c.l.b16 %v207
  %v217 = vunpack.c.h.b16 %v207
  %v218 = vunpack.c.l.b16 %v208
  %v219 = vunpack.c.h.b16 %v208
  %v220 = vunpack.c.l.b16 %v209
  %v221 = vunpack.c.h.b16 %v209
  %v222 = vpack.c.b16 %v216, %v214
  %v223 = vpack.c.b16 %v217, %v215
  %v224 = vpack.c.b16 %v220, %v218
  %v225 = vpack.c.b16 %v221, %v219
  %v229 = vsel %vm146, %v223, 0
  %v232 = vsel %vm146, %v225, 0
  %234 = vmatprep.subr.bf16.mxu0 0
  %235 = vmatpush1.bf16.msra.mxu0 %v128
  %236 = vmatprep.subr.bf16.mxu0 0
  %237 = vmatpush1.bf16.msra.mxu0 %v127
  %238 = vmatprep.subr.bf16.mxu0 0
  %239 = vmatpush1.bf16.msra.mxu0 %v126
  %240 = vmatprep.subr.bf16.mxu0 0
  %241 = vmatpush1.bf16.msra.mxu0 %v125
  %242 = vmatprep.subr.bf16.mxu0 0
  %243 = vmatpush1.bf16.msra.mxu0 %v124
  %244 = vmatprep.subr.bf16.mxu0 0
  %245 = vmatpush1.bf16.msra.mxu0 %v123
  %246 = vmatprep.subr.bf16.mxu0 0
  %247 = vmatpush1.bf16.msra.mxu0 %v122
  %248 = vmatprep.subr.bf16.mxu0 0
  %249 = vmatpush1.bf16.msra.mxu0 %v121
  %250 = vmatprep.subr.bf16.mxu0 0
  %251 = vmatpush2.bf16.msra.mxu0 0
  %252 = vmatprep.subr.bf16.mxu0 0
  %253 = vmatpush2.bf16.msra.mxu0 0
  %254 = vmatprep.subr.bf16.mxu0 0
  %255 = vmatpush2.bf16.msra.mxu0 0
  %256 = vmatprep.subr.bf16.mxu0 0
  %257 = vmatpush2.bf16.msra.mxu0 %v155
  %258 = vmatprep.subr.bf16.mxu0 0
  %259 = vmatpush2.bf16.msra.mxu0 %v132
  %260 = vmatprep.subr.bf16.mxu0 0
  %261 = vmatpush2.bf16.msra.mxu0 %v131
  %262 = vmatprep.subr.bf16.mxu0 0
  %263 = vmatpush2.bf16.msra.mxu0 %v130
  %264 = vmatprep.subr.bf16.mxu0 0
  %265 = vmatpush2.bf16.msra.mxu0 %v129
  %266 = vmatprep.mubr.bf16.mxu0 %v229
  %267 = vmatmul.mubr.bf16.gmra.mxu0 %v222
  %v268 = vpop.f32.mrf.mxu0
  %v269 = vadd.f32 0.0, %v268
  %v270 = vpop.f32.mrf.mxu0
  %v271 = vpop.f32.mrf.mxu0
  %v272 = vadd.f32 0.0, %v271
  %v273 = vpop.f32.mrf.mxu0
  %274 = vmatprep.mubr.bf16.mxu0 %v232
  %275 = vmatmul.mubr.bf16.gmra.mxu0 %v224
  %v276 = vpop.f32.mrf.mxu0
  %v277 = vadd.f32 0.0, %v276
  %v278 = vpop.f32.mrf.mxu0
  %v279 = vpop.f32.mrf.mxu0
  %v280 = vadd.f32 0.0, %v279
  %v281 = vpop.f32.mrf.mxu0
  %282 = vdwg.mxu0
  %v283 = vmax.f32 %v192, %v269
  %v284 = vmax.f32 %v195, %v272
  %v285 = vmax.f32 %v200, %v277
  %v286 = vmax.f32 %v203, %v280
  %v287 = vld [vmem:[%s2] sm:$0xff]
  %v288 = vld [vmem:[%s2 + $0x8] sm:$0xff]
  %v289 = vld [vmem:[%s2 + $0x10] sm:$0xff]
  %v290 = vld [vmem:[%s2 + $0x18] sm:$0xff]
  %v295 = vunpack.c.l.b16 %v287
  %v296 = vunpack.c.h.b16 %v287
  %v297 = vunpack.c.l.b16 %v288
  %v298 = vunpack.c.h.b16 %v288
  %v299 = vunpack.c.l.b16 %v289
  %v300 = vunpack.c.h.b16 %v289
  %v301 = vunpack.c.l.b16 %v290
  %v302 = vunpack.c.h.b16 %v290
  %v303 = vpack.c.b16 %v297, %v295
  %v304 = vpack.c.b16 %v298, %v296
  %v305 = vpack.c.b16 %v301, %v299
  %v306 = vpack.c.b16 %v302, %v300
  %v310 = vsel %vm146, %v304, 0
  %v313 = vsel %vm146, %v306, 0
  %315 = vmatprep.subr.bf16.mxu0 0
  %316 = vmatpush1.bf16.msra.mxu0 %v128
  %317 = vmatprep.subr.bf16.mxu0 0
  %318 = vmatpush1.bf16.msra.mxu0 %v127
  %319 = vmatprep.subr.bf16.mxu0 0
  %320 = vmatpush1.bf16.msra.mxu0 %v126
  %321 = vmatprep.subr.bf16.mxu0 0
  %322 = vmatpush1.bf16.msra.mxu0 %v125
  %323 = vmatprep.subr.bf16.mxu0 0
  %324 = vmatpush1.bf16.msra.mxu0 %v124
  %325 = vmatprep.subr.bf16.mxu0 0
  %326 = vmatpush1.bf16.msra.mxu0 %v123
  %327 = vmatprep.subr.bf16.mxu0 0
  %328 = vmatpush1.bf16.msra.mxu0 %v122
  %329 = vmatprep.subr.bf16.mxu0 0
  %330 = vmatpush1.bf16.msra.mxu0 %v121
  %331 = vmatprep.subr.bf16.mxu0 0
  %332 = vmatpush2.bf16.msra.mxu0 0
  %333 = vmatprep.subr.bf16.mxu0 0
  %334 = vmatpush2.bf16.msra.mxu0 0
  %335 = vmatprep.subr.bf16.mxu0 0
  %336 = vmatpush2.bf16.msra.mxu0 0
  %337 = vmatprep.subr.bf16.mxu0 0
  %338 = vmatpush2.bf16.msra.mxu0 %v155
  %339 = vmatprep.subr.bf16.mxu0 0
  %340 = vmatpush2.bf16.msra.mxu0 %v132
  %341 = vmatprep.subr.bf16.mxu0 0
  %342 = vmatpush2.bf16.msra.mxu0 %v131
  %343 = vmatprep.subr.bf16.mxu0 0
  %344 = vmatpush2.bf16.msra.mxu0 %v130
  %345 = vmatprep.subr.bf16.mxu0 0
  %346 = vmatpush2.bf16.msra.mxu0 %v129
  %347 = vmatprep.mubr.bf16.mxu0 %v310
  %348 = vmatmul.mubr.bf16.gmra.mxu0 %v303
  %v349 = vpop.f32.mrf.mxu0
  %v350 = vadd.f32 0.0, %v349
  %v351 = vpop.f32.mrf.mxu0
  %v352 = vpop.f32.mrf.mxu0
  %v353 = vadd.f32 0.0, %v352
  %v354 = vpop.f32.mrf.mxu0
  %355 = vmatprep.mubr.bf16.mxu0 %v313
  %356 = vmatmul.mubr.bf16.gmra.mxu0 %v305
  %v357 = vpop.f32.mrf.mxu0
  %v358 = vadd.f32 0.0, %v357
  %v359 = vpop.f32.mrf.mxu0
  %v360 = vpop.f32.mrf.mxu0
  %v361 = vadd.f32 0.0, %v360
  %v362 = vpop.f32.mrf.mxu0
  %363 = vdwg.mxu0
  %v364 = vld [vmem:[%s3] sm:$0xff]
  %v365 = vld [vmem:[%s3 + $0x8] sm:$0xff]
  %v366 = vld [vmem:[%s3 + $0x10] sm:$0xff]
  %v367 = vld [vmem:[%s3 + $0x18] sm:$0xff]
  %v372 = vunpack.c.l.b16 %v364
  %v373 = vunpack.c.h.b16 %v364
  %v374 = vunpack.c.l.b16 %v365
  %v375 = vunpack.c.h.b16 %v365
  %v376 = vunpack.c.l.b16 %v366
  %v377 = vunpack.c.h.b16 %v366
  %v378 = vunpack.c.l.b16 %v367
  %v379 = vunpack.c.h.b16 %v367
  %v380 = vpack.c.b16 %v374, %v372
  %v381 = vpack.c.b16 %v375, %v373
  %v382 = vpack.c.b16 %v378, %v376
  %v383 = vpack.c.b16 %v379, %v377
  %v387 = vsel %vm146, %v381, 0
  %v390 = vsel %vm146, %v383, 0
  %392 = vmatprep.subr.bf16.mxu0 0
  %393 = vmatpush1.bf16.msra.mxu0 %v128
  %394 = vmatprep.subr.bf16.mxu0 0
  %395 = vmatpush1.bf16.msra.mxu0 %v127
  %396 = vmatprep.subr.bf16.mxu0 0
  %397 = vmatpush1.bf16.msra.mxu0 %v126
  %398 = vmatprep.subr.bf16.mxu0 0
  %399 = vmatpush1.bf16.msra.mxu0 %v125
  %400 = vmatprep.subr.bf16.mxu0 0
  %401 = vmatpush1.bf16.msra.mxu0 %v124
  %402 = vmatprep.subr.bf16.mxu0 0
  %403 = vmatpush1.bf16.msra.mxu0 %v123
  %404 = vmatprep.subr.bf16.mxu0 0
  %405 = vmatpush1.bf16.msra.mxu0 %v122
  %406 = vmatprep.subr.bf16.mxu0 0
  %407 = vmatpush1.bf16.msra.mxu0 %v121
  %408 = vmatprep.subr.bf16.mxu0 0
  %409 = vmatpush2.bf16.msra.mxu0 0
  %410 = vmatprep.subr.bf16.mxu0 0
  %411 = vmatpush2.bf16.msra.mxu0 0
  %412 = vmatprep.subr.bf16.mxu0 0
  %413 = vmatpush2.bf16.msra.mxu0 0
  %414 = vmatprep.subr.bf16.mxu0 0
  %415 = vmatpush2.bf16.msra.mxu0 %v155
  %416 = vmatprep.subr.bf16.mxu0 0
  %417 = vmatpush2.bf16.msra.mxu0 %v132
  %418 = vmatprep.subr.bf16.mxu0 0
  %419 = vmatpush2.bf16.msra.mxu0 %v131
  %420 = vmatprep.subr.bf16.mxu0 0
  %421 = vmatpush2.bf16.msra.mxu0 %v130
  %422 = vmatprep.subr.bf16.mxu0 0
  %423 = vmatpush2.bf16.msra.mxu0 %v129
  %424 = vmatprep.mubr.bf16.mxu0 %v387
  %425 = vmatmul.mubr.bf16.gmra.mxu0 %v380
  %v426 = vpop.f32.mrf.mxu0
  %v427 = vadd.f32 0.0, %v426
  %v428 = vpop.f32.mrf.mxu0
  %v429 = vpop.f32.mrf.mxu0
  %v430 = vadd.f32 0.0, %v429
  %v431 = vpop.f32.mrf.mxu0
  %432 = vmatprep.mubr.bf16.mxu0 %v390
  %433 = vmatmul.mubr.bf16.gmra.mxu0 %v382
  %v434 = vpop.f32.mrf.mxu0
  %v435 = vadd.f32 0.0, %v434
  %v436 = vpop.f32.mrf.mxu0
  %v437 = vpop.f32.mrf.mxu0
  %v438 = vadd.f32 0.0, %v437
  %v439 = vpop.f32.mrf.mxu0
  %440 = vdwg.mxu0
  %v441 = vmax.f32 %v350, %v427
  %v442 = vmax.f32 %v353, %v430
  %v443 = vmax.f32 %v358, %v435
  %v444 = vmax.f32 %v361, %v438
  %v445 = vmax.f32 %v283, %v441
  %v446 = vmax.f32 %v284, %v442
  %v447 = vmax.f32 %v285, %v443
  %v448 = vmax.f32 %v286, %v444
  %v449 = vld [vmem:[%s5] sm:$0x1]
  %v451 = vlaneseq
  %v452 = vshrl.u32 %v451, 7
  %v453 = vsub.s32 0, %v452
  %v454 = vrot.slane %v449, %v453
  %v456 = vadd.f32 %v445, %v454
  %v457 = vadd.f32 %v446, %v454
  %v458 = vadd.f32 %v447, %v454
  %v459 = vadd.f32 %v448, %v454
  %v460 = vmax.f32 %v456, 0.0
  %v461 = vmax.f32 %v457, 0.0
  %v462 = vmax.f32 %v458, 0.0
  %v463 = vmax.f32 %v459, 0.0
  %v464 = vpack.c.bf16 %v461, %v460
  %v465 = vpack.c.bf16 %v463, %v462
  %v468 = vunpack.c.l.b16 %v464
  %v469 = vunpack.c.h.b16 %v464
  %v470 = vunpack.c.l.b16 %v465
  %v471 = vunpack.c.h.b16 %v465
  %v472 = vpack.c.b16 %v468, %v468
  %v473 = vpack.c.b16 %v469, %v469
  %v474 = vpack.c.b16 %v470, %v470
  %v475 = vpack.c.b16 %v471, %v471
  %480 = vst [vmem:[%s6] sm:$0xf] %v472
  %481 = vst [vmem:[%s6 + $0x4] sm:$0xf] %v473
  %482 = vst [vmem:[%s6 + $0x8] sm:$0xf] %v474
  %483 = vst [vmem:[%s6 + $0xc] sm:$0xf] %v475
  // Predicated region
  $region26: #{garment_classifier.4} parent=0 // pred_check
    _
  $region27: #{garment_classifier.4} parent=0 // pred_check_branch
    %485 = sbr.rel (0) target = $region29
  $region28: #{garment_classifier.4} parent=0 // pred_region
    _
  $region29: #{garment_classifier.4} parent=0 // pred_fallthru
    _
  // Predicated region
  $region30: #{garment_classifier.4} parent=0 // pred_check
    _
  $region31: #{garment_classifier.4} parent=0 // pred_check_branch
    %487 = sbr.rel (0) target = $region33
  $region32: #{garment_classifier.4} parent=0 // pred_region
    _
  $region33: #{garment_classifier.4} parent=0 // pred_fallthru
    _

// kernel: garment_classifier.5
$region0: #{garment_classifier.5}
  #allocation0 [shape = 'u32[]', space=smem, size = 0x4, offset = 0x4, fixed_abs, tag = 'smem constant byte address 0x4 - core index']
  #allocation1 [shape = 'u32[144,128]{1,0:T(1,128)}', space=vmem, size = 0x12000, scoped, tag = 'internal scratch']
  %s0 = inlined_call_operand.vmem [shape: bf16[2,2048], index: 0, kind: input, shape index: {}]
  %s1 = inlined_call_operand.vmem [shape: bf16[2048,128], index: 1, kind: input, shape index: {}]
  %s2 = inlined_call_operand.vmem [shape: f32[1,128], index: 2, kind: input, shape index: {}]
  %s3 = inlined_call_operand.vmem [shape: bf16[128,128], index: 3, kind: input, shape index: {}]
  %s4 = inlined_call_operand.vmem [shape: f32[1,128], index: 4, kind: input, shape index: {}]
  %s5 = inlined_call_operand.vmem [shape: bf16[128,128], index: 5, kind: input, shape index: {}]
  %s6 = inlined_call_operand.vmem [shape: f32[1,128], index: 6, kind: input, shape index: {}]
  %s7 = inlined_call_operand.hbm [shape: f32[2,128], index: 7, kind: output, shape index: {}]
  %s8 = sld [smem:[#allocation0]]
  $region38: #{garment_classifier.5} parent=0
    _
  %s10 = ssub.s32 1, %s8
  %s11 = scalar_select 0, %s10, %s8
  $region1: #{garment_classifier.5} parent=0
    #allocation2 [shape = 'u8[1024]{0}', space=vmem, size = 0x400, scoped, tag = 'output window, operand 0, single buffered']
    #allocation3 [shape = 's32[1]{0}', space=sflag, size = 0x4, scoped, tag = 'scoped memory for garment_classifier.5']
    %12 = vsyncpa [#allocation3], 0
    // Predicated region
    $region2: #{garment_classifier.5} parent=1 // pred_check
      _
    $region3: #{garment_classifier.5} parent=1 // pred_check_branch
      %14 = sbr.rel (0) target = $region5
    $region4: #{garment_classifier.5} parent=1 // pred_region
      _
    $region5: #{garment_classifier.5} parent=1 // pred_fallthru
      _
    // Predicated region
    $region6: #{garment_classifier.5} parent=1 // pred_check
      _
    $region7: #{garment_classifier.5} parent=1 // pred_check_branch
      %16 = sbr.rel (0) target = $region9
    $region8: #{garment_classifier.5} parent=1 // pred_region
      _
    $region9: #{garment_classifier.5} parent=1 // pred_fallthru
      _
    // Predicated region
    $region10: #{garment_classifier.5} parent=1 // pred_check
      _
    $region11: #{garment_classifier.5} parent=1 // pred_check_branch
      %18 = sbr.rel (0) target = $region13
    $region12: #{garment_classifier.5} parent=1 // pred_region
      _
    $region13: #{garment_classifier.5} parent=1 // pred_fallthru
      _
    // Predicated region
    $region14: #{garment_classifier.5} parent=1 // pred_check
      _
    $region15: #{garment_classifier.5} parent=1 // pred_check_branch
      %20 = sbr.rel (0) target = $region17
    $region16: #{garment_classifier.5} parent=1 // pred_region
      _
    $region17: #{garment_classifier.5} parent=1 // pred_fallthru
      _
    // Predicated region
    $region18: #{garment_classifier.5} parent=1 // pred_check
      _
    $region19: #{garment_classifier.5} parent=1 // pred_check_branch
      %22 = sbr.rel (0) target = $region21
    $region20: #{garment_classifier.5} parent=1 // pred_region
      _
    $region21: #{garment_classifier.5} parent=1 // pred_fallthru
      _
    // Predicated region
    $region22: #{garment_classifier.5} parent=1 // pred_check
      _
    $region23: #{garment_classifier.5} parent=1 // pred_check_branch
      %24 = sbr.rel (0) target = $region25
    $region24: #{garment_classifier.5} parent=1 // pred_region
      _
    $region25: #{garment_classifier.5} parent=1 // pred_fallthru
      _
    // Predicated region
    $region26: #{garment_classifier.5} parent=1 // pred_check
      _
    $region27: #{garment_classifier.5} parent=1 // pred_check_branch
      %26 = sbr.rel (0) target = $region29
    $region28: #{garment_classifier.5} parent=1 // pred_region
      _
    $region29: #{garment_classifier.5} parent=1 // pred_fallthru
      _
    %v28 = vld [vmem:[%s0] sm:$0xff]
    %v29 = vld [vmem:[%s0 + $0x8] sm:$0xff]
    %v30 = vld [vmem:[%s1] sm:$0xf]
    %v31 = vld [vmem:[%s1 + $0x4] sm:$0xf]
    %v32 = vld [vmem:[%s1 + $0x8] sm:$0xf]
    %v33 = vld [vmem:[%s1 + $0xc] sm:$0xf]
    %v34 = vld [vmem:[%s1 + $0x10] sm:$0xf]
    %v35 = vld [vmem:[%s1 + $0x14] sm:$0xf]
    %v36 = vld [vmem:[%s1 + $0x18] sm:$0xf]
    %v37 = vld [vmem:[%s1 + $0x1c] sm:$0xf]
    %v38 = vld [vmem:[%s1 + $0x20] sm:$0xf]
    %v39 = vld [vmem:[%s1 + $0x24] sm:$0xf]
    %v40 = vld [vmem:[%s1 + $0x28] sm:$0xf]
    %v41 = vld [vmem:[%s1 + $0x2c] sm:$0xf]
    %v42 = vld [vmem:[%s1 + $0x30] sm:$0xf]
    %v43 = vld [vmem:[%s1 + $0x34] sm:$0xf]
    %v44 = vld [vmem:[%s1 + $0x38] sm:$0xf]
    %v45 = vld [vmem:[%s1 + $0x3c] sm:$0xf]
    %v46 = vld [vmem:[%s1 + $0x40] sm:$0xf]
    %v47 = vld [vmem:[%s1 + $0x44] sm:$0xf]
    %v48 = vld [vmem:[%s1 + $0x48] sm:$0xf]
    %v49 = vld [vmem:[%s1 + $0x4c] sm:$0xf]
    %v50 = vld [vmem:[%s1 + $0x50] sm:$0xf]
    %v51 = vld [vmem:[%s1 + $0x54] sm:$0xf]
    %v52 = vld [vmem:[%s1 + $0x58] sm:$0xf]
    %v53 = vld [vmem:[%s1 + $0x5c] sm:$0xf]
    %v54 = vld [vmem:[%s1 + $0x60] sm:$0xf]
    %v55 = vld [vmem:[%s1 + $0x64] sm:$0xf]
    %v56 = vld [vmem:[%s1 + $0x68] sm:$0xf]
    %v57 = vld [vmem:[%s1 + $0x6c] sm:$0xf]
    %v58 = vld [vmem:[%s1 + $0x70] sm:$0xf]
    %v59 = vld [vmem:[%s1 + $0x74] sm:$0xf]
    %v60 = vld [vmem:[%s1 + $0x78] sm:$0xf]
    %v61 = vld [vmem:[%s1 + $0x7c] sm:$0xf]
    %v62 = vld [vmem:[%s1 + $0x80] sm:$0xf]
    %v63 = vld [vmem:[%s1 + $0x84] sm:$0xf]
    %v64 = vld [vmem:[%s1 + $0x88] sm:$0xf]
    %v65 = vld [vmem:[%s1 + $0x8c] sm:$0xf]
    %v66 = vld [vmem:[%s1 + $0x90] sm:$0xf]
    %v67 = vld [vmem:[%s1 + $0x94] sm:$0xf]
    %v68 = vld [vmem:[%s1 + $0x98] sm:$0xf]
    %v69 = vld [vmem:[%s1 + $0x9c] sm:$0xf]
    %v70 = vld [vmem:[%s1 + $0xa0] sm:$0xf]
    %v71 = vld [vmem:[%s1 + $0xa4] sm:$0xf]
    %v72 = vld [vmem:[%s1 + $0xa8] sm:$0xf]
    %v73 = vld [vmem:[%s1 + $0xac] sm:$0xf]
    %v74 = vld [vmem:[%s1 + $0xb0] sm:$0xf]
    %v75 = vld [vmem:[%s1 + $0xb4] sm:$0xf]
    %v76 = vld [vmem:[%s1 + $0xb8] sm:$0xf]
    %v77 = vld [vmem:[%s1 + $0xbc] sm:$0xf]
    %v78 = vld [vmem:[%s1 + $0xc0] sm:$0xf]
    %v79 = vld [vmem:[%s1 + $0xc4] sm:$0xf]
    %v80 = vld [vmem:[%s1 + $0xc8] sm:$0xf]
    %v81 = vld [vmem:[%s1 + $0xcc] sm:$0xf]
    %v82 = vld [vmem:[%s1 + $0xd0] sm:$0xf]
    %v83 = vld [vmem:[%s1 + $0xd4] sm:$0xf]
    %v84 = vld [vmem:[%s1 + $0xd8] sm:$0xf]
    %v85 = vld [vmem:[%s1 + $0xdc] sm:$0xf]
    %v86 = vld [vmem:[%s1 + $0xe0] sm:$0xf]
    %v87 = vld [vmem:[%s1 + $0xe4] sm:$0xf]
    %v88 = vld [vmem:[%s1 + $0xe8] sm:$0xf]
    %v89 = vld [vmem:[%s1 + $0xec] sm:$0xf]
    %v90 = vld [vmem:[%s1 + $0xf0] sm:$0xf]
    %v91 = vld [vmem:[%s1 + $0xf4] sm:$0xf]
    %v92 = vld [vmem:[%s1 + $0xf8] sm:$0xf]
    %v93 = vld [vmem:[%s1 + $0xfc] sm:$0xf]
    %v94 = vld [vmem:[%s1 + $0x100] sm:$0xf]
    %v95 = vld [vmem:[%s1 + $0x104] sm:$0xf]
    %v96 = vld [vmem:[%s1 + $0x108] sm:$0xf]
    %v97 = vld [vmem:[%s1 + $0x10c] sm:$0xf]
    %v98 = vld [vmem:[%s1 + $0x110] sm:$0xf]
    %v99 = vld [vmem:[%s1 + $0x114] sm:$0xf]
    %v100 = vld [vmem:[%s1 + $0x118] sm:$0xf]
    %v101 = vld [vmem:[%s1 + $0x11c] sm:$0xf]
    %v102 = vld [vmem:[%s1 + $0x120] sm:$0xf]
    %v103 = vld [vmem:[%s1 + $0x124] sm:$0xf]
    %v104 = vld [vmem:[%s1 + $0x128] sm:$0xf]
    %v105 = vld [vmem:[%s1 + $0x12c] sm:$0xf]
    %v106 = vld [vmem:[%s1 + $0x130] sm:$0xf]
    %v107 = vld [vmem:[%s1 + $0x134] sm:$0xf]
    %v108 = vld [vmem:[%s1 + $0x138] sm:$0xf]
    %v109 = vld [vmem:[%s1 + $0x13c] sm:$0xf]
    %v110 = vld [vmem:[%s1 + $0x140] sm:$0xf]
    %v111 = vld [vmem:[%s1 + $0x144] sm:$0xf]
    %v112 = vld [vmem:[%s1 + $0x148] sm:$0xf]
    %v113 = vld [vmem:[%s1 + $0x14c] sm:$0xf]
    %v114 = vld [vmem:[%s1 + $0x150] sm:$0xf]
    %v115 = vld [vmem:[%s1 + $0x154] sm:$0xf]
    %v116 = vld [vmem:[%s1 + $0x158] sm:$0xf]
    %v117 = vld [vmem:[%s1 + $0x15c] sm:$0xf]
    %v118 = vld [vmem:[%s1 + $0x160] sm:$0xf]
    %v119 = vld [vmem:[%s1 + $0x164] sm:$0xf]
    %v120 = vld [vmem:[%s1 + $0x168] sm:$0xf]
    %v121 = vld [vmem:[%s1 + $0x16c] sm:$0xf]
    %v122 = vld [vmem:[%s1 + $0x170] sm:$0xf]
    %v123 = vld [vmem:[%s1 + $0x174] sm:$0xf]
    %v124 = vld [vmem:[%s1 + $0x178] sm:$0xf]
    %v125 = vld [vmem:[%s1 + $0x17c] sm:$0xf]
    %v126 = vld [vmem:[%s1 + $0x180] sm:$0xf]
    %v127 = vld [vmem:[%s1 + $0x184] sm:$0xf]
    %v128 = vld [vmem:[%s1 + $0x188] sm:$0xf]
    %v129 = vld [vmem:[%s1 + $0x18c] sm:$0xf]
    %v130 = vld [vmem:[%s1 + $0x190] sm:$0xf]
    %v131 = vld [vmem:[%s1 + $0x194] sm:$0xf]
    %v132 = vld [vmem:[%s1 + $0x198] sm:$0xf]
    %v133 = vld [vmem:[%s1 + $0x19c] sm:$0xf]
    %v134 = vld [vmem:[%s1 + $0x1a0] sm:$0xf]
    %v135 = vld [vmem:[%s1 + $0x1a4] sm:$0xf]
    %v136 = vld [vmem:[%s1 + $0x1a8] sm:$0xf]
    %v137 = vld [vmem:[%s1 + $0x1ac] sm:$0xf]
    %v138 = vld [vmem:[%s1 + $0x1b0] sm:$0xf]
    %v139 = vld [vmem:[%s1 + $0x1b4] sm:$0xf]
    %v140 = vld [vmem:[%s1 + $0x1b8] sm:$0xf]
    %v141 = vld [vmem:[%s1 + $0x1bc] sm:$0xf]
    %v142 = vld [vmem:[%s1 + $0x1c0] sm:$0xf]
    %v143 = vld [vmem:[%s1 + $0x1c4] sm:$0xf]
    %v144 = vld [vmem:[%s1 + $0x1c8] sm:$0xf]
    %v145 = vld [vmem:[%s1 + $0x1cc] sm:$0xf]
    %v146 = vld [vmem:[%s1 + $0x1d0] sm:$0xf]
    %v147 = vld [vmem:[%s1 + $0x1d4] sm:$0xf]
    %v148 = vld [vmem:[%s1 + $0x1d8] sm:$0xf]
    %v149 = vld [vmem:[%s1 + $0x1dc] sm:$0xf]
    %v150 = vld [vmem:[%s1 + $0x1e0] sm:$0xf]
    %v151 = vld [vmem:[%s1 + $0x1e4] sm:$0xf]
    %v152 = vld [vmem:[%s1 + $0x1e8] sm:$0xf]
    %v153 = vld [vmem:[%s1 + $0x1ec] sm:$0xf]
    %v154 = vld [vmem:[%s1 + $0x1f0] sm:$0xf]
    %v155 = vld [vmem:[%s1 + $0x1f4] sm:$0xf]
    %v156 = vld [vmem:[%s1 + $0x1f8] sm:$0xf]
    %v157 = vld [vmem:[%s1 + $0x1fc] sm:$0xf]
    %v158 = vld [vmem:[%s1 + $0x200] sm:$0xf]
    %v159 = vld [vmem:[%s1 + $0x204] sm:$0xf]
    %v160 = vld [vmem:[%s1 + $0x208] sm:$0xf]
    %v161 = vld [vmem:[%s1 + $0x20c] sm:$0xf]
    %v162 = vld [vmem:[%s1 + $0x210] sm:$0xf]
    %v163 = vld [vmem:[%s1 + $0x214] sm:$0xf]
    %v164 = vld [vmem:[%s1 + $0x218] sm:$0xf]
    %v165 = vld [vmem:[%s1 + $0x21c] sm:$0xf]
    %v166 = vld [vmem:[%s1 + $0x220] sm:$0xf]
    %v167 = vld [vmem:[%s1 + $0x224] sm:$0xf]
    %v168 = vld [vmem:[%s1 + $0x228] sm:$0xf]
    %v169 = vld [vmem:[%s1 + $0x22c] sm:$0xf]
    %v170 = vld [vmem:[%s1 + $0x230] sm:$0xf]
    %v171 = vld [vmem:[%s1 + $0x234] sm:$0xf]
    %v172 = vld [vmem:[%s1 + $0x238] sm:$0xf]
    %v173 = vld [vmem:[%s1 + $0x23c] sm:$0xf]
    %v174 = vld [vmem:[%s1 + $0x240] sm:$0xf]
    %v175 = vld [vmem:[%s1 + $0x244] sm:$0xf]
    %v176 = vld [vmem:[%s1 + $0x248] sm:$0xf]
    %v177 = vld [vmem:[%s1 + $0x24c] sm:$0xf]
    %v178 = vld [vmem:[%s1 + $0x250] sm:$0xf]
    %v179 = vld [vmem:[%s1 + $0x254] sm:$0xf]
    %v180 = vld [vmem:[%s1 + $0x258] sm:$0xf]
    %v181 = vld [vmem:[%s1 + $0x25c] sm:$0xf]
    %v182 = vld [vmem:[%s1 + $0x260] sm:$0xf]
    %v183 = vld [vmem:[%s1 + $0x264] sm:$0xf]
    %v184 = vld [vmem:[%s1 + $0x268] sm:$0xf]
    %v185 = vld [vmem:[%s1 + $0x26c] sm:$0xf]
    %v186 = vld [vmem:[%s1 + $0x270] sm:$0xf]
    %v187 = vld [vmem:[%s1 + $0x274] sm:$0xf]
    %v188 = vld [vmem:[%s1 + $0x278] sm:$0xf]
    %v189 = vld [vmem:[%s1 + $0x27c] sm:$0xf]
    %v190 = vld [vmem:[%s1 + $0x280] sm:$0xf]
    %v191 = vld [vmem:[%s1 + $0x284] sm:$0xf]
    %v192 = vld [vmem:[%s1 + $0x288] sm:$0xf]
    %v193 = vld [vmem:[%s1 + $0x28c] sm:$0xf]
    %v194 = vld [vmem:[%s1 + $0x290] sm:$0xf]
    %v195 = vld [vmem:[%s1 + $0x294] sm:$0xf]
    %v196 = vld [vmem:[%s1 + $0x298] sm:$0xf]
    %v197 = vld [vmem:[%s1 + $0x29c] sm:$0xf]
    %v198 = vld [vmem:[%s1 + $0x2a0] sm:$0xf]
    %v199 = vld [vmem:[%s1 + $0x2a4] sm:$0xf]
    %v200 = vld [vmem:[%s1 + $0x2a8] sm:$0xf]
    %v201 = vld [vmem:[%s1 + $0x2ac] sm:$0xf]
    %v202 = vld [vmem:[%s1 + $0x2b0] sm:$0xf]
    %v203 = vld [vmem:[%s1 + $0x2b4] sm:$0xf]
    %v204 = vld [vmem:[%s1 + $0x2b8] sm:$0xf]
    %v205 = vld [vmem:[%s1 + $0x2bc] sm:$0xf]
    %v206 = vld [vmem:[%s1 + $0x2c0] sm:$0xf]
    %v207 = vld [vmem:[%s1 + $0x2c4] sm:$0xf]
    %v208 = vld [vmem:[%s1 + $0x2c8] sm:$0xf]
    %v209 = vld [vmem:[%s1 + $0x2cc] sm:$0xf]
    %v210 = vld [vmem:[%s1 + $0x2d0] sm:$0xf]
    %v211 = vld [vmem:[%s1 + $0x2d4] sm:$0xf]
    %v212 = vld [vmem:[%s1 + $0x2d8] sm:$0xf]
    %v213 = vld [vmem:[%s1 + $0x2dc] sm:$0xf]
    %v214 = vld [vmem:[%s1 + $0x2e0] sm:$0xf]
    %v215 = vld [vmem:[%s1 + $0x2e4] sm:$0xf]
    %v216 = vld [vmem:[%s1 + $0x2e8] sm:$0xf]
    %v217 = vld [vmem:[%s1 + $0x2ec] sm:$0xf]
    %v218 = vld [vmem:[%s1 + $0x2f0] sm:$0xf]
    %v219 = vld [vmem:[%s1 + $0x2f4] sm:$0xf]
    %v220 = vld [vmem:[%s1 + $0x2f8] sm:$0xf]
    %v221 = vld [vmem:[%s1 + $0x2fc] sm:$0xf]
    %v222 = vld [vmem:[%s1 + $0x300] sm:$0xf]
    %v223 = vld [vmem:[%s1 + $0x304] sm:$0xf]
    %v224 = vld [vmem:[%s1 + $0x308] sm:$0xf]
    %v225 = vld [vmem:[%s1 + $0x30c] sm:$0xf]
    %v226 = vld [vmem:[%s1 + $0x310] sm:$0xf]
    %v227 = vld [vmem:[%s1 + $0x314] sm:$0xf]
    %v228 = vld [vmem:[%s1 + $0x318] sm:$0xf]
    %v229 = vld [vmem:[%s1 + $0x31c] sm:$0xf]
    %v230 = vld [vmem:[%s1 + $0x320] sm:$0xf]
    %v231 = vld [vmem:[%s1 + $0x324] sm:$0xf]
    %v232 = vld [vmem:[%s1 + $0x328] sm:$0xf]
    %v233 = vld [vmem:[%s1 + $0x32c] sm:$0xf]
    %v234 = vld [vmem:[%s1 + $0x330] sm:$0xf]
    %v235 = vld [vmem:[%s1 + $0x334] sm:$0xf]
    %v236 = vld [vmem:[%s1 + $0x338] sm:$0xf]
    %v237 = vld [vmem:[%s1 + $0x33c] sm:$0xf]
    %v238 = vld [vmem:[%s1 + $0x340] sm:$0xf]
    %v239 = vld [vmem:[%s1 + $0x344] sm:$0xf]
    %v240 = vld [vmem:[%s1 + $0x348] sm:$0xf]
    %v241 = vld [vmem:[%s1 + $0x34c] sm:$0xf]
    %v242 = vld [vmem:[%s1 + $0x350] sm:$0xf]
    %v243 = vld [vmem:[%s1 + $0x354] sm:$0xf]
    %v244 = vld [vmem:[%s1 + $0x358] sm:$0xf]
    %v245 = vld [vmem:[%s1 + $0x35c] sm:$0xf]
    %v246 = vld [vmem:[%s1 + $0x360] sm:$0xf]
    %v247 = vld [vmem:[%s1 + $0x364] sm:$0xf]
    %v248 = vld [vmem:[%s1 + $0x368] sm:$0xf]
    %v249 = vld [vmem:[%s1 + $0x36c] sm:$0xf]
    %v250 = vld [vmem:[%s1 + $0x370] sm:$0xf]
    %v251 = vld [vmem:[%s1 + $0x374] sm:$0xf]
    %v252 = vld [vmem:[%s1 + $0x378] sm:$0xf]
    %v253 = vld [vmem:[%s1 + $0x37c] sm:$0xf]
    %v254 = vld [vmem:[%s1 + $0x380] sm:$0xf]
    %v255 = vld [vmem:[%s1 + $0x384] sm:$0xf]
    %v256 = vld [vmem:[%s1 + $0x388] sm:$0xf]
    %v257 = vld [vmem:[%s1 + $0x38c] sm:$0xf]
    %v258 = vld [vmem:[%s1 + $0x390] sm:$0xf]
    %v259 = vld [vmem:[%s1 + $0x394] sm:$0xf]
    %v260 = vld [vmem:[%s1 + $0x398] sm:$0xf]
    %v261 = vld [vmem:[%s1 + $0x39c] sm:$0xf]
    %v262 = vld [vmem:[%s1 + $0x3a0] sm:$0xf]
    %v263 = vld [vmem:[%s1 + $0x3a4] sm:$0xf]
    %v264 = vld [vmem:[%s1 + $0x3a8] sm:$0xf]
    %v265 = vld [vmem:[%s1 + $0x3ac] sm:$0xf]
    %v266 = vld [vmem:[%s1 + $0x3b0] sm:$0xf]
    %v267 = vld [vmem:[%s1 + $0x3b4] sm:$0xf]
    %v268 = vld [vmem:[%s1 + $0x3b8] sm:$0xf]
    %v269 = vld [vmem:[%s1 + $0x3bc] sm:$0xf]
    %v270 = vld [vmem:[%s1 + $0x3c0] sm:$0xf]
    %v271 = vld [vmem:[%s1 + $0x3c4] sm:$0xf]
    %v272 = vld [vmem:[%s1 + $0x3c8] sm:$0xf]
    %v273 = vld [vmem:[%s1 + $0x3cc] sm:$0xf]
    %v274 = vld [vmem:[%s1 + $0x3d0] sm:$0xf]
    %v275 = vld [vmem:[%s1 + $0x3d4] sm:$0xf]
    %v276 = vld [vmem:[%s1 + $0x3d8] sm:$0xf]
    %v277 = vld [vmem:[%s1 + $0x3dc] sm:$0xf]
    %v278 = vld [vmem:[%s1 + $0x3e0] sm:$0xf]
    %v279 = vld [vmem:[%s1 + $0x3e4] sm:$0xf]
    %v280 = vld [vmem:[%s1 + $0x3e8] sm:$0xf]
    %v281 = vld [vmem:[%s1 + $0x3ec] sm:$0xf]
    %v282 = vld [vmem:[%s1 + $0x3f0] sm:$0xf]
    %v283 = vld [vmem:[%s1 + $0x3f4] sm:$0xf]
    %v284 = vld [vmem:[%s1 + $0x3f8] sm:$0xf]
    %v285 = vld [vmem:[%s1 + $0x3fc] sm:$0xf]
    %v286 = vld [vmem:[%s2] sm:$0x1]
    %v288 = vlaneseq
    %v289 = vshrl.u32 %v288, 7
    %v290 = vsub.s32 0, %v289
    %v291 = vrot.slane %v286, %v290
    %v295 = vcombine.high %v28, %v28
    %v297 = vunpack.c.l.s4 1966171168
    %v298 = vunpack.c.0.s8 %v297
    %v299 = vlaneseq
    %v300 = vshrl.u32 %v299, 7
    %v301 = vsub.s32 %v298, %v300
    %v302 = vrot.slane %v28, %v301
    %v304 = vunpack.c.l.s4 1966171168
    %v305 = vunpack.c.0.s8 %v304
    %v306 = vlaneseq
    %v307 = vshrl.u32 %v306, 7
    %v308 = vsub.s32 %v305, %v307
    %v309 = vrot.slane %v295, %v308
    %v310 = vcombine.high %v302, %v302
    %v311 = vcombine.high %v309, %v309
    %v313 = vunpack.c.l.s4 1966171168
    %v314 = vunpack.c.0.s8 %v313
    %v315 = vlaneseq
    %v316 = vshrl.u32 %v315, 7
    %v317 = vsub.s32 %v314, %v316
    %v318 = vrot.slane %v302, %v317
    %v320 = vunpack.c.l.s4 1966171168
    %v321 = vunpack.c.0.s8 %v320
    %v322 = vlaneseq
    %v323 = vshrl.u32 %v322, 7
    %v324 = vsub.s32 %v321, %v323
    %v325 = vrot.slane %v309, %v324
    %v327 = vunpack.c.l.s4 1966171168
    %v328 = vunpack.c.0.s8 %v327
    %v329 = vlaneseq
    %v330 = vshrl.u32 %v329, 7
    %v331 = vsub.s32 %v328, %v330
    %v332 = vrot.slane %v310, %v331
    %v334 = vunpack.c.l.s4 1966171168
    %v335 = vunpack.c.0.s8 %v334
    %v336 = vlaneseq
    %v337 = vshrl.u32 %v336, 7
    %v338 = vsub.s32 %v335, %v337
    %v339 = vrot.slane %v311, %v338
    %v340 = vcombine.high %v318, %v318
    %v341 = vcombine.high %v325, %v325
    %v342 = vcombine.high %v332, %v332
    %v343 = vcombine.high %v339, %v339
    %v344 = vcombine.high %v29, %v29
    %v346 = vunpack.c.l.s4 1966171168
    %v347 = vunpack.c.0.s8 %v346
    %v348 = vlaneseq
    %v349 = vshrl.u32 %v348, 7
    %v350 = vsub.s32 %v347, %v349
    %v351 = vrot.slane %v29, %v350
    %v353 = vunpack.c.l.s4 1966171168
    %v354 = vunpack.c.0.s8 %v353
    %v355 = vlaneseq
    %v356 = vshrl.u32 %v355, 7
    %v357 = vsub.s32 %v354, %v356
    %v358 = vrot.slane %v344, %v357
    %v359 = vcombine.high %v351, %v351
    %v360 = vcombine.high %v358, %v358
    %v362 = vunpack.c.l.s4 1966171168
    %v363 = vunpack.c.0.s8 %v362
    %v364 = vlaneseq
    %v365 = vshrl.u32 %v364, 7
    %v366 = vsub.s32 %v363, %v365
    %v367 = vrot.slane %v351, %v366
    %v369 = vunpack.c.l.s4 1966171168
    %v370 = vunpack.c.0.s8 %v369
    %v371 = vlaneseq
    %v372 = vshrl.u32 %v371, 7
    %v373 = vsub.s32 %v370, %v372
    %v374 = vrot.slane %v358, %v373
    %v376 = vunpack.c.l.s4 1966171168
    %v377 = vunpack.c.0.s8 %v376
    %v378 = vlaneseq
    %v379 = vshrl.u32 %v378, 7
    %v380 = vsub.s32 %v377, %v379
    %v381 = vrot.slane %v359, %v380
    %v383 = vunpack.c.l.s4 1966171168
    %v384 = vunpack.c.0.s8 %v383
    %v385 = vlaneseq
    %v386 = vshrl.u32 %v385, 7
    %v387 = vsub.s32 %v384, %v386
    %v388 = vrot.slane %v360, %v387
    %v389 = vcombine.high %v367, %v367
    %v390 = vcombine.high %v374, %v374
    %v391 = vcombine.high %v381, %v381
    %v392 = vcombine.high %v388, %v388
    %v665 = vunpack.c.l.b16 %v30
    %v666 = vunpack.c.l.b16 %v31
    %v667 = vunpack.c.l.b16 %v32
    %v668 = vunpack.c.l.b16 %v33
    %v669 = vunpack.c.l.b16 %v34
    %v670 = vunpack.c.l.b16 %v35
    %v671 = vunpack.c.l.b16 %v36
    %v672 = vunpack.c.l.b16 %v37
    %v673 = vunpack.c.l.b16 %v38
    %v674 = vunpack.c.l.b16 %v39
    %v675 = vunpack.c.l.b16 %v40
    %v676 = vunpack.c.l.b16 %v41
    %v677 = vunpack.c.l.b16 %v42
    %v678 = vunpack.c.l.b16 %v43
    %v679 = vunpack.c.l.b16 %v44
    %v680 = vunpack.c.l.b16 %v45
    %v681 = vunpack.c.l.b16 %v46
    %v682 = vunpack.c.l.b16 %v47
    %v683 = vunpack.c.l.b16 %v48
    %v684 = vunpack.c.l.b16 %v49
    %v685 = vunpack.c.l.b16 %v50
    %v686 = vunpack.c.l.b16 %v51
    %v687 = vunpack.c.l.b16 %v52
    %v688 = vunpack.c.l.b16 %v53
    %v689 = vunpack.c.l.b16 %v54
    %v690 = vunpack.c.l.b16 %v55
    %v691 = vunpack.c.l.b16 %v56
    %v692 = vunpack.c.l.b16 %v57
    %v693 = vunpack.c.l.b16 %v58
    %v694 = vunpack.c.l.b16 %v59
    %v695 = vunpack.c.l.b16 %v60
    %v696 = vunpack.c.l.b16 %v61
    %v697 = vunpack.c.l.b16 %v62
    %v698 = vunpack.c.l.b16 %v63
    %v699 = vunpack.c.l.b16 %v64
    %v700 = vunpack.c.l.b16 %v65
    %v701 = vunpack.c.l.b16 %v66
    %v702 = vunpack.c.l.b16 %v67
    %v703 = vunpack.c.l.b16 %v68
    %v704 = vunpack.c.l.b16 %v69
    %v705 = vunpack.c.l.b16 %v70
    %v706 = vunpack.c.l.b16 %v71
    %v707 = vunpack.c.l.b16 %v72
    %v708 = vunpack.c.l.b16 %v73
    %v709 = vunpack.c.l.b16 %v74
    %v710 = vunpack.c.l.b16 %v75
    %v711 = vunpack.c.l.b16 %v76
    %v712 = vunpack.c.l.b16 %v77
    %v713 = vunpack.c.l.b16 %v78
    %v714 = vunpack.c.l.b16 %v79
    %v715 = vunpack.c.l.b16 %v80
    %v716 = vunpack.c.l.b16 %v81
    %v717 = vunpack.c.l.b16 %v82
    %v718 = vunpack.c.l.b16 %v83
    %v719 = vunpack.c.l.b16 %v84
    %v720 = vunpack.c.l.b16 %v85
    %v721 = vunpack.c.l.b16 %v86
    %v722 = vunpack.c.l.b16 %v87
    %v723 = vunpack.c.l.b16 %v88
    %v724 = vunpack.c.l.b16 %v89
    %v725 = vunpack.c.l.b16 %v90
    %v726 = vunpack.c.l.b16 %v91
    %v727 = vunpack.c.l.b16 %v92
    %v728 = vunpack.c.l.b16 %v93
    %v729 = vunpack.c.l.b16 %v94
    %v730 = vunpack.c.l.b16 %v95
    %v731 = vunpack.c.l.b16 %v96
    %v732 = vunpack.c.l.b16 %v97
    %v733 = vunpack.c.l.b16 %v98
    %v734 = vunpack.c.l.b16 %v99
    %v735 = vunpack.c.l.b16 %v100
    %v736 = vunpack.c.l.b16 %v101
    %v737 = vunpack.c.l.b16 %v102
    %v738 = vunpack.c.l.b16 %v103
    %v739 = vunpack.c.l.b16 %v104
    %v740 = vunpack.c.l.b16 %v105
    %v741 = vunpack.c.l.b16 %v106
    %v742 = vunpack.c.l.b16 %v107
    %v743 = vunpack.c.l.b16 %v108
    %v744 = vunpack.c.l.b16 %v109
    %v745 = vunpack.c.l.b16 %v110
    %v746 = vunpack.c.l.b16 %v111
    %v747 = vunpack.c.l.b16 %v112
    %v748 = vunpack.c.l.b16 %v113
    %v749 = vunpack.c.l.b16 %v114
    %v750 = vunpack.c.l.b16 %v115
    %v751 = vunpack.c.l.b16 %v116
    %v752 = vunpack.c.l.b16 %v117
    %v753 = vunpack.c.l.b16 %v118
    %v754 = vunpack.c.l.b16 %v119
    %v755 = vunpack.c.l.b16 %v120
    %v756 = vunpack.c.l.b16 %v121
    %v757 = vunpack.c.l.b16 %v122
    %v758 = vunpack.c.l.b16 %v123
    %v759 = vunpack.c.l.b16 %v124
    %v760 = vunpack.c.l.b16 %v125
    %v761 = vunpack.c.l.b16 %v126
    %v762 = vunpack.c.l.b16 %v127
    %v763 = vunpack.c.l.b16 %v128
    %v764 = vunpack.c.l.b16 %v129
    %v765 = vunpack.c.l.b16 %v130
    %v766 = vunpack.c.l.b16 %v131
    %v767 = vunpack.c.l.b16 %v132
    %v768 = vunpack.c.l.b16 %v133
    %v769 = vunpack.c.l.b16 %v134
    %v770 = vunpack.c.l.b16 %v135
    %v771 = vunpack.c.l.b16 %v136
    %v772 = vunpack.c.l.b16 %v137
    %v773 = vunpack.c.l.b16 %v138
    %v774 = vunpack.c.l.b16 %v139
    %v775 = vunpack.c.l.b16 %v140
    %v776 = vunpack.c.l.b16 %v141
    %v777 = vunpack.c.l.b16 %v142
    %v778 = vunpack.c.l.b16 %v143
    %v779 = vunpack.c.l.b16 %v144
    %v780 = vunpack.c.l.b16 %v145
    %v781 = vunpack.c.l.b16 %v146
    %v782 = vunpack.c.l.b16 %v147
    %v783 = vunpack.c.l.b16 %v148
    %v784 = vunpack.c.l.b16 %v149
    %v785 = vunpack.c.l.b16 %v150
    %v786 = vunpack.c.l.b16 %v151
    %v787 = vunpack.c.l.b16 %v152
    %v788 = vunpack.c.l.b16 %v153
    %v789 = vunpack.c.l.b16 %v154
    %v790 = vunpack.c.l.b16 %v155
    %v791 = vunpack.c.l.b16 %v156
    %v792 = vunpack.c.l.b16 %v157
    %v793 = vunpack.c.l.b16 %v158
    %v794 = vunpack.c.l.b16 %v159
    %v795 = vunpack.c.l.b16 %v160
    %v796 = vunpack.c.l.b16 %v161
    %v797 = vunpack.c.l.b16 %v162
    %v798 = vunpack.c.l.b16 %v163
    %v799 = vunpack.c.l.b16 %v164
    %v800 = vunpack.c.l.b16 %v165
    %v801 = vunpack.c.l.b16 %v166
    %v802 = vunpack.c.l.b16 %v167
    %v803 = vunpack.c.l.b16 %v168
    %v804 = vunpack.c.l.b16 %v169
    %v805 = vunpack.c.l.b16 %v170
    %v806 = vunpack.c.l.b16 %v171
    %v807 = vunpack.c.l.b16 %v172
    %v808 = vunpack.c.l.b16 %v173
    %v809 = vunpack.c.l.b16 %v174
    %v810 = vunpack.c.l.b16 %v175
    %v811 = vunpack.c.l.b16 %v176
    %v812 = vunpack.c.l.b16 %v177
    %v813 = vunpack.c.l.b16 %v178
    %v814 = vunpack.c.l.b16 %v179
    %v815 = vunpack.c.l.b16 %v180
    %v816 = vunpack.c.l.b16 %v181
    %v817 = vunpack.c.l.b16 %v182
    %v818 = vunpack.c.l.b16 %v183
    %v819 = vunpack.c.l.b16 %v184
    %v820 = vunpack.c.l.b16 %v185
    %v821 = vunpack.c.l.b16 %v186
    %v822 = vunpack.c.l.b16 %v187
    %v823 = vunpack.c.l.b16 %v188
    %v824 = vunpack.c.l.b16 %v189
    %v825 = vunpack.c.l.b16 %v190
    %v826 = vunpack.c.l.b16 %v191
    %v827 = vunpack.c.l.b16 %v192
    %v828 = vunpack.c.l.b16 %v193
    %v829 = vunpack.c.l.b16 %v194
    %v830 = vunpack.c.l.b16 %v195
    %v831 = vunpack.c.l.b16 %v196
    %v832 = vunpack.c.l.b16 %v197
    %v833 = vunpack.c.l.b16 %v198
    %v834 = vunpack.c.l.b16 %v199
    %v835 = vunpack.c.l.b16 %v200
    %v836 = vunpack.c.l.b16 %v201
    %v837 = vunpack.c.l.b16 %v202
    %v838 = vunpack.c.l.b16 %v203
    %v839 = vunpack.c.l.b16 %v204
    %v840 = vunpack.c.l.b16 %v205
    %v841 = vunpack.c.l.b16 %v206
    %v842 = vunpack.c.l.b16 %v207
    %v843 = vunpack.c.l.b16 %v208
    %v844 = vunpack.c.l.b16 %v209
    %v845 = vunpack.c.l.b16 %v210
    %v846 = vunpack.c.l.b16 %v211
    %v847 = vunpack.c.l.b16 %v212
    %v848 = vunpack.c.l.b16 %v213
    %v849 = vunpack.c.l.b16 %v214
    %v850 = vunpack.c.l.b16 %v215
    %v851 = vunpack.c.l.b16 %v216
    %v852 = vunpack.c.l.b16 %v217
    %v853 = vunpack.c.l.b16 %v218
    %v854 = vunpack.c.l.b16 %v219
    %v855 = vunpack.c.l.b16 %v220
    %v856 = vunpack.c.l.b16 %v221
    %v857 = vunpack.c.l.b16 %v222
    %v858 = vunpack.c.l.b16 %v223
    %v859 = vunpack.c.l.b16 %v224
    %v860 = vunpack.c.l.b16 %v225
    %v861 = vunpack.c.l.b16 %v226
    %v862 = vunpack.c.l.b16 %v227
    %v863 = vunpack.c.l.b16 %v228
    %v864 = vunpack.c.l.b16 %v229
    %v865 = vunpack.c.l.b16 %v230
    %v866 = vunpack.c.l.b16 %v231
    %v867 = vunpack.c.l.b16 %v232
    %v868 = vunpack.c.l.b16 %v233
    %v869 = vunpack.c.l.b16 %v234
    %v870 = vunpack.c.l.b16 %v235
    %v871 = vunpack.c.l.b16 %v236
    %v872 = vunpack.c.l.b16 %v237
    %v873 = vunpack.c.l.b16 %v238
    %v874 = vunpack.c.l.b16 %v239
    %v875 = vunpack.c.l.b16 %v240
    %v876 = vunpack.c.l.b16 %v241
    %v877 = vunpack.c.l.b16 %v242
    %v878 = vunpack.c.l.b16 %v243
    %v879 = vunpack.c.l.b16 %v244
    %v880 = vunpack.c.l.b16 %v245
    %v881 = vunpack.c.l.b16 %v246
    %v882 = vunpack.c.l.b16 %v247
    %v883 = vunpack.c.l.b16 %v248
    %v884 = vunpack.c.l.b16 %v249
    %v885 = vunpack.c.l.b16 %v250
    %v886 = vunpack.c.l.b16 %v251
    %v887 = vunpack.c.l.b16 %v252
    %v888 = vunpack.c.l.b16 %v253
    %v889 = vunpack.c.l.b16 %v254
    %v890 = vunpack.c.l.b16 %v255
    %v891 = vunpack.c.l.b16 %v256
    %v892 = vunpack.c.l.b16 %v257
    %v893 = vunpack.c.l.b16 %v258
    %v894 = vunpack.c.l.b16 %v259
    %v895 = vunpack.c.l.b16 %v260
    %v896 = vunpack.c.l.b16 %v261
    %v897 = vunpack.c.l.b16 %v262
    %v898 = vunpack.c.l.b16 %v263
    %v899 = vunpack.c.l.b16 %v264
    %v900 = vunpack.c.l.b16 %v265
    %v901 = vunpack.c.l.b16 %v266
    %v902 = vunpack.c.l.b16 %v267
    %v903 = vunpack.c.l.b16 %v268
    %v904 = vunpack.c.l.b16 %v269
    %v905 = vunpack.c.l.b16 %v270
    %v906 = vunpack.c.l.b16 %v271
    %v907 = vunpack.c.l.b16 %v272
    %v908 = vunpack.c.l.b16 %v273
    %v909 = vunpack.c.l.b16 %v274
    %v910 = vunpack.c.l.b16 %v275
    %v911 = vunpack.c.l.b16 %v276
    %v912 = vunpack.c.l.b16 %v277
    %v913 = vunpack.c.l.b16 %v278
    %v914 = vunpack.c.l.b16 %v279
    %v915 = vunpack.c.l.b16 %v280
    %v916 = vunpack.c.l.b16 %v281
    %v917 = vunpack.c.l.b16 %v282
    %v918 = vunpack.c.l.b16 %v283
    %v919 = vunpack.c.l.b16 %v284
    %v920 = vunpack.c.l.b16 %v285
    %v921 = vpack.c.b16 %v666, %v665
    %v922 = vpack.c.b16 %v668, %v667
    %v923 = vpack.c.b16 %v670, %v669
    %v924 = vpack.c.b16 %v672, %v671
    %v925 = vpack.c.b16 %v674, %v673
    %v926 = vpack.c.b16 %v676, %v675
    %v927 = vpack.c.b16 %v678, %v677
    %v928 = vpack.c.b16 %v680, %v679
    %v929 = vpack.c.b16 %v682, %v681
    %v930 = vpack.c.b16 %v684, %v683
    %v931 = vpack.c.b16 %v686, %v685
    %v932 = vpack.c.b16 %v688, %v687
    %v933 = vpack.c.b16 %v690, %v689
    %v934 = vpack.c.b16 %v692, %v691
    %v935 = vpack.c.b16 %v694, %v693
    %v936 = vpack.c.b16 %v696, %v695
    %v937 = vpack.c.b16 %v698, %v697
    %v938 = vpack.c.b16 %v700, %v699
    %v939 = vpack.c.b16 %v702, %v701
    %v940 = vpack.c.b16 %v704, %v703
    %v941 = vpack.c.b16 %v706, %v705
    %v942 = vpack.c.b16 %v708, %v707
    %v943 = vpack.c.b16 %v710, %v709
    %v944 = vpack.c.b16 %v712, %v711
    %v945 = vpack.c.b16 %v714, %v713
    %v946 = vpack.c.b16 %v716, %v715
    %v947 = vpack.c.b16 %v718, %v717
    %v948 = vpack.c.b16 %v720, %v719
    %v949 = vpack.c.b16 %v722, %v721
    %v950 = vpack.c.b16 %v724, %v723
    %v951 = vpack.c.b16 %v726, %v725
    %v952 = vpack.c.b16 %v728, %v727
    %v953 = vpack.c.b16 %v730, %v729
    %v954 = vpack.c.b16 %v732, %v731
    %v955 = vpack.c.b16 %v734, %v733
    %v956 = vpack.c.b16 %v736, %v735
    %v957 = vpack.c.b16 %v738, %v737
    %v958 = vpack.c.b16 %v740, %v739
    %v959 = vpack.c.b16 %v742, %v741
    %v960 = vpack.c.b16 %v744, %v743
    %v961 = vpack.c.b16 %v746, %v745
    %v962 = vpack.c.b16 %v748, %v747
    %v963 = vpack.c.b16 %v750, %v749
    %v964 = vpack.c.b16 %v752, %v751
    %v965 = vpack.c.b16 %v754, %v753
    %v966 = vpack.c.b16 %v756, %v755
    %v967 = vpack.c.b16 %v758, %v757
    %v968 = vpack.c.b16 %v760, %v759
    %v969 = vpack.c.b16 %v762, %v761
    %v970 = vpack.c.b16 %v764, %v763
    %v971 = vpack.c.b16 %v766, %v765
    %v972 = vpack.c.b16 %v768, %v767
    %v973 = vpack.c.b16 %v770, %v769
    %v974 = vpack.c.b16 %v772, %v771
    %v975 = vpack.c.b16 %v774, %v773
    %v976 = vpack.c.b16 %v776, %v775
    %v977 = vpack.c.b16 %v778, %v777
    %v978 = vpack.c.b16 %v780, %v779
    %v979 = vpack.c.b16 %v782, %v781
    %v980 = vpack.c.b16 %v784, %v783
    %v981 = vpack.c.b16 %v786, %v785
    %v982 = vpack.c.b16 %v788, %v787
    %v983 = vpack.c.b16 %v790, %v789
    %v984 = vpack.c.b16 %v792, %v791
    %v985 = vpack.c.b16 %v794, %v793
    %v986 = vpack.c.b16 %v796, %v795
    %v987 = vpack.c.b16 %v798, %v797
    %v988 = vpack.c.b16 %v800, %v799
    %v989 = vpack.c.b16 %v802, %v801
    %v990 = vpack.c.b16 %v804, %v803
    %v991 = vpack.c.b16 %v806, %v805
    %v992 = vpack.c.b16 %v808, %v807
    %v993 = vpack.c.b16 %v810, %v809
    %v994 = vpack.c.b16 %v812, %v811
    %v995 = vpack.c.b16 %v814, %v813
    %v996 = vpack.c.b16 %v816, %v815
    %v997 = vpack.c.b16 %v818, %v817
    %v998 = vpack.c.b16 %v820, %v819
    %v999 = vpack.c.b16 %v822, %v821
    %v1000 = vpack.c.b16 %v824, %v823
    %v1001 = vpack.c.b16 %v826, %v825
    %v1002 = vpack.c.b16 %v828, %v827
    %v1003 = vpack.c.b16 %v830, %v829
    %v1004 = vpack.c.b16 %v832, %v831
    %v1005 = vpack.c.b16 %v834, %v833
    %v1006 = vpack.c.b16 %v836, %v835
    %v1007 = vpack.c.b16 %v838, %v837
    %v1008 = vpack.c.b16 %v840, %v839
    %v1009 = vpack.c.b16 %v842, %v841
    %v1010 = vpack.c.b16 %v844, %v843
    %v1011 = vpack.c.b16 %v846, %v845
    %v1012 = vpack.c.b16 %v848, %v847
    %v1013 = vpack.c.b16 %v850, %v849
    %v1014 = vpack.c.b16 %v852, %v851
    %v1015 = vpack.c.b16 %v854, %v853
    %v1016 = vpack.c.b16 %v856, %v855
    %v1017 = vpack.c.b16 %v858, %v857
    %v1018 = vpack.c.b16 %v860, %v859
    %v1019 = vpack.c.b16 %v862, %v861
    %v1020 = vpack.c.b16 %v864, %v863
    %v1021 = vpack.c.b16 %v866, %v865
    %v1022 = vpack.c.b16 %v868, %v867
    %v1023 = vpack.c.b16 %v870, %v869
    %v1024 = vpack.c.b16 %v872, %v871
    %v1025 = vpack.c.b16 %v874, %v873
    %v1026 = vpack.c.b16 %v876, %v875
    %v1027 = vpack.c.b16 %v878, %v877
    %v1028 = vpack.c.b16 %v880, %v879
    %v1029 = vpack.c.b16 %v882, %v881
    %v1030 = vpack.c.b16 %v884, %v883
    %v1031 = vpack.c.b16 %v886, %v885
    %v1032 = vpack.c.b16 %v888, %v887
    %v1033 = vpack.c.b16 %v890, %v889
    %v1034 = vpack.c.b16 %v892, %v891
    %v1035 = vpack.c.b16 %v894, %v893
    %v1036 = vpack.c.b16 %v896, %v895
    %v1037 = vpack.c.b16 %v898, %v897
    %v1038 = vpack.c.b16 %v900, %v899
    %v1039 = vpack.c.b16 %v902, %v901
    %v1040 = vpack.c.b16 %v904, %v903
    %v1041 = vpack.c.b16 %v906, %v905
    %v1042 = vpack.c.b16 %v908, %v907
    %v1043 = vpack.c.b16 %v910, %v909
    %v1044 = vpack.c.b16 %v912, %v911
    %v1045 = vpack.c.b16 %v914, %v913
    %v1046 = vpack.c.b16 %v916, %v915
    %v1047 = vpack.c.b16 %v918, %v917
    %v1048 = vpack.c.b16 %v920, %v919
    %1177 = vmatprep.subr.bf16.mxu0 0
    %1178 = vmatpush1.bf16.msra.mxu0 %v928
    %1179 = vmatprep.subr.bf16.mxu0 0
    %1180 = vmatpush1.bf16.msra.mxu0 %v927
    %1181 = vmatprep.subr.bf16.mxu0 0
    %1182 = vmatpush1.bf16.msra.mxu0 %v926
    %1183 = vmatprep.subr.bf16.mxu0 0
    %1184 = vmatpush1.bf16.msra.mxu0 %v925
    %1185 = vmatprep.subr.bf16.mxu0 0
    %1186 = vmatpush1.bf16.msra.mxu0 %v924
    %1187 = vmatprep.subr.bf16.mxu0 0
    %1188 = vmatpush1.bf16.msra.mxu0 %v923
    %1189 = vmatprep.subr.bf16.mxu0 0
    %1190 = vmatpush1.bf16.msra.mxu0 %v922
    %1191 = vmatprep.subr.bf16.mxu0 0
    %1192 = vmatpush1.bf16.msra.mxu0 %v921
    %1193 = vmatprep.subr.bf16.mxu0 0
    %1194 = vmatpush2.bf16.msra.mxu0 %v936
    %1195 = vmatprep.subr.bf16.mxu0 0
    %1196 = vmatpush2.bf16.msra.mxu0 %v935
    %1197 = vmatprep.subr.bf16.mxu0 0
    %1198 = vmatpush2.bf16.msra.mxu0 %v934
    %1199 = vmatprep.subr.bf16.mxu0 0
    %1200 = vmatpush2.bf16.msra.mxu0 %v933
    %1201 = vmatprep.subr.bf16.mxu0 0
    %1202 = vmatpush2.bf16.msra.mxu0 %v932
    %1203 = vmatprep.subr.bf16.mxu0 0
    %1204 = vmatpush2.bf16.msra.mxu0 %v931
    %1205 = vmatprep.subr.bf16.mxu0 0
    %1206 = vmatpush2.bf16.msra.mxu0 %v930
    %1207 = vmatprep.subr.bf16.mxu0 0
    %1208 = vmatpush2.bf16.msra.mxu0 %v929
    %1209 = vmatprep.mubr.bf16.mxu0 %v332
    %1210 = vmatmul.mubr.bf16.gmra.mxu0 %v318
    %v1211 = vpop.f32.mrf.mxu0
    %v1212 = vadd.f32 %v291, %v1211
    %v1213 = vpop.f32.mrf.mxu0
    %v1214 = vpop.f32.mrf.mxu0
    %v1215 = vpop.f32.mrf.mxu0
    %1216 = vdwg.mxu0
    %1217 = vmatprep.subr.bf16.mxu0 0
    %1218 = vmatpush1.bf16.msra.mxu0 %v944
    %1219 = vmatprep.subr.bf16.mxu0 0
    %1220 = vmatpush1.bf16.msra.mxu0 %v943
    %1221 = vmatprep.subr.bf16.mxu0 0
    %1222 = vmatpush1.bf16.msra.mxu0 %v942
    %1223 = vmatprep.subr.bf16.mxu0 0
    %1224 = vmatpush1.bf16.msra.mxu0 %v941
    %1225 = vmatprep.subr.bf16.mxu0 0
    %1226 = vmatpush1.bf16.msra.mxu0 %v940
    %1227 = vmatprep.subr.bf16.mxu0 0
    %1228 = vmatpush1.bf16.msra.mxu0 %v939
    %1229 = vmatprep.subr.bf16.mxu0 0
    %1230 = vmatpush1.bf16.msra.mxu0 %v938
    %1231 = vmatprep.subr.bf16.mxu0 0
    %1232 = vmatpush1.bf16.msra.mxu0 %v937
    %1233 = vmatprep.subr.bf16.mxu0 0
    %1234 = vmatpush2.bf16.msra.mxu0 %v952
    %1235 = vmatprep.subr.bf16.mxu0 0
    %1236 = vmatpush2.bf16.msra.mxu0 %v951
    %1237 = vmatprep.subr.bf16.mxu0 0
    %1238 = vmatpush2.bf16.msra.mxu0 %v950
    %1239 = vmatprep.subr.bf16.mxu0 0
    %1240 = vmatpush2.bf16.msra.mxu0 %v949
    %1241 = vmatprep.subr.bf16.mxu0 0
    %1242 = vmatpush2.bf16.msra.mxu0 %v948
    %1243 = vmatprep.subr.bf16.mxu0 0
    %1244 = vmatpush2.bf16.msra.mxu0 %v947
    %1245 = vmatprep.subr.bf16.mxu0 0
    %1246 = vmatpush2.bf16.msra.mxu0 %v946
    %1247 = vmatprep.subr.bf16.mxu0 0
    %1248 = vmatpush2.bf16.msra.mxu0 %v945
    %1249 = vmatprep.mubr.bf16.mxu0 %v342
    %1250 = vmatmul.mubr.bf16.gmra.mxu0 %v340
    %v1251 = vpop.f32.mrf.mxu0
    %v1252 = vadd.f32 %v1212, %v1251
    %v1253 = vpop.f32.mrf.mxu0
    %v1254 = vpop.f32.mrf.mxu0
    %v1255 = vpop.f32.mrf.mxu0
    %1256 = vdwg.mxu0
    %1257 = vmatprep.subr.bf16.mxu0 0
    %1258 = vmatpush1.bf16.msra.mxu0 %v960
    %1259 = vmatprep.subr.bf16.mxu0 0
    %1260 = vmatpush1.bf16.msra.mxu0 %v959
    %1261 = vmatprep.subr.bf16.mxu0 0
    %1262 = vmatpush1.bf16.msra.mxu0 %v958
    %1263 = vmatprep.subr.bf16.mxu0 0
    %1264 = vmatpush1.bf16.msra.mxu0 %v957
    %1265 = vmatprep.subr.bf16.mxu0 0
    %1266 = vmatpush1.bf16.msra.mxu0 %v956
    %1267 = vmatprep.subr.bf16.mxu0 0
    %1268 = vmatpush1.bf16.msra.mxu0 %v955
    %1269 = vmatprep.subr.bf16.mxu0 0
    %1270 = vmatpush1.bf16.msra.mxu0 %v954
    %1271 = vmatprep.subr.bf16.mxu0 0
    %1272 = vmatpush1.bf16.msra.mxu0 %v953
    %1273 = vmatprep.subr.bf16.mxu0 0
    %1274 = vmatpush2.bf16.msra.mxu0 %v968
    %1275 = vmatprep.subr.bf16.mxu0 0
    %1276 = vmatpush2.bf16.msra.mxu0 %v967
    %1277 = vmatprep.subr.bf16.mxu0 0
    %1278 = vmatpush2.bf16.msra.mxu0 %v966
    %1279 = vmatprep.subr.bf16.mxu0 0
    %1280 = vmatpush2.bf16.msra.mxu0 %v965
    %1281 = vmatprep.subr.bf16.mxu0 0
    %1282 = vmatpush2.bf16.msra.mxu0 %v964
    %1283 = vmatprep.subr.bf16.mxu0 0
    %1284 = vmatpush2.bf16.msra.mxu0 %v963
    %1285 = vmatprep.subr.bf16.mxu0 0
    %1286 = vmatpush2.bf16.msra.mxu0 %v962
    %1287 = vmatprep.subr.bf16.mxu0 0
    %1288 = vmatpush2.bf16.msra.mxu0 %v961
    %1289 = vmatprep.mubr.bf16.mxu0 %v339
    %1290 = vmatmul.mubr.bf16.gmra.mxu0 %v325
    %v1291 = vpop.f32.mrf.mxu0
    %v1292 = vadd.f32 %v1252, %v1291
    %v1293 = vpop.f32.mrf.mxu0
    %v1294 = vpop.f32.mrf.mxu0
    %v1295 = vpop.f32.mrf.mxu0
    %1296 = vdwg.mxu0
    %1297 = vmatprep.subr.bf16.mxu0 0
    %1298 = vmatpush1.bf16.msra.mxu0 %v976
    %1299 = vmatprep.subr.bf16.mxu0 0
    %1300 = vmatpush1.bf16.msra.mxu0 %v975
    %1301 = vmatprep.subr.bf16.mxu0 0
    %1302 = vmatpush1.bf16.msra.mxu0 %v974
    %1303 = vmatprep.subr.bf16.mxu0 0
    %1304 = vmatpush1.bf16.msra.mxu0 %v973
    %1305 = vmatprep.subr.bf16.mxu0 0
    %1306 = vmatpush1.bf16.msra.mxu0 %v972
    %1307 = vmatprep.subr.bf16.mxu0 0
    %1308 = vmatpush1.bf16.msra.mxu0 %v971
    %1309 = vmatprep.subr.bf16.mxu0 0
    %1310 = vmatpush1.bf16.msra.mxu0 %v970
    %1311 = vmatprep.subr.bf16.mxu0 0
    %1312 = vmatpush1.bf16.msra.mxu0 %v969
    %1313 = vmatprep.subr.bf16.mxu0 0
    %1314 = vmatpush2.bf16.msra.mxu0 %v984
    %1315 = vmatprep.subr.bf16.mxu0 0
    %1316 = vmatpush2.bf16.msra.mxu0 %v983
    %1317 = vmatprep.subr.bf16.mxu0 0
    %1318 = vmatpush2.bf16.msra.mxu0 %v982
    %1319 = vmatprep.subr.bf16.mxu0 0
    %1320 = vmatpush2.bf16.msra.mxu0 %v981
    %1321 = vmatprep.subr.bf16.mxu0 0
    %1322 = vmatpush2.bf16.msra.mxu0 %v980
    %1323 = vmatprep.subr.bf16.mxu0 0
    %1324 = vmatpush2.bf16.msra.mxu0 %v979
    %1325 = vmatprep.subr.bf16.mxu0 0
    %1326 = vmatpush2.bf16.msra.mxu0 %v978
    %1327 = vmatprep.subr.bf16.mxu0 0
    %1328 = vmatpush2.bf16.msra.mxu0 %v977
    %1329 = vmatprep.mubr.bf16.mxu0 %v343
    %1330 = vmatmul.mubr.bf16.gmra.mxu0 %v341
    %v1331 = vpop.f32.mrf.mxu0
    %v1332 = vadd.f32 %v1292, %v1331
    %v1333 = vpop.f32.mrf.mxu0
    %v1334 = vpop.f32.mrf.mxu0
    %v1335 = vpop.f32.mrf.mxu0
    %1336 = vdwg.mxu0
    %1337 = vmatprep.subr.bf16.mxu0 0
    %1338 = vmatpush1.bf16.msra.mxu0 %v992
    %1339 = vmatprep.subr.bf16.mxu0 0
    %1340 = vmatpush1.bf16.msra.mxu0 %v991
    %1341 = vmatprep.subr.bf16.mxu0 0
    %1342 = vmatpush1.bf16.msra.mxu0 %v990
    %1343 = vmatprep.subr.bf16.mxu0 0
    %1344 = vmatpush1.bf16.msra.mxu0 %v989
    %1345 = vmatprep.subr.bf16.mxu0 0
    %1346 = vmatpush1.bf16.msra.mxu0 %v988
    %1347 = vmatprep.subr.bf16.mxu0 0
    %1348 = vmatpush1.bf16.msra.mxu0 %v987
    %1349 = vmatprep.subr.bf16.mxu0 0
    %1350 = vmatpush1.bf16.msra.mxu0 %v986
    %1351 = vmatprep.subr.bf16.mxu0 0
    %1352 = vmatpush1.bf16.msra.mxu0 %v985
    %1353 = vmatprep.subr.bf16.mxu0 0
    %1354 = vmatpush2.bf16.msra.mxu0 %v1000
    %1355 = vmatprep.subr.bf16.mxu0 0
    %1356 = vmatpush2.bf16.msra.mxu0 %v999
    %1357 = vmatprep.subr.bf16.mxu0 0
    %1358 = vmatpush2.bf16.msra.mxu0 %v998
    %1359 = vmatprep.subr.bf16.mxu0 0
    %1360 = vmatpush2.bf16.msra.mxu0 %v997
    %1361 = vmatprep.subr.bf16.mxu0 0
    %1362 = vmatpush2.bf16.msra.mxu0 %v996
    %1363 = vmatprep.subr.bf16.mxu0 0
    %1364 = vmatpush2.bf16.msra.mxu0 %v995
    %1365 = vmatprep.subr.bf16.mxu0 0
    %1366 = vmatpush2.bf16.msra.mxu0 %v994
    %1367 = vmatprep.subr.bf16.mxu0 0
    %1368 = vmatpush2.bf16.msra.mxu0 %v993
    %1369 = vmatprep.mubr.bf16.mxu0 %v381
    %1370 = vmatmul.mubr.bf16.gmra.mxu0 %v367
    %v1371 = vpop.f32.mrf.mxu0
    %v1372 = vadd.f32 %v1332, %v1371
    %v1373 = vpop.f32.mrf.mxu0
    %v1374 = vpop.f32.mrf.mxu0
    %v1375 = vpop.f32.mrf.mxu0
    %1376 = vdwg.mxu0
    %1377 = vmatprep.subr.bf16.mxu0 0
    %1378 = vmatpush1.bf16.msra.mxu0 %v1008
    %1379 = vmatprep.subr.bf16.mxu0 0
    %1380 = vmatpush1.bf16.msra.mxu0 %v1007
    %1381 = vmatprep.subr.bf16.mxu0 0
    %1382 = vmatpush1.bf16.msra.mxu0 %v1006
    %1383 = vmatprep.subr.bf16.mxu0 0
    %1384 = vmatpush1.bf16.msra.mxu0 %v1005
    %1385 = vmatprep.subr.bf16.mxu0 0
    %1386 = vmatpush1.bf16.msra.mxu0 %v1004
    %1387 = vmatprep.subr.bf16.mxu0 0
    %1388 = vmatpush1.bf16.msra.mxu0 %v1003
    %1389 = vmatprep.subr.bf16.mxu0 0
    %1390 = vmatpush1.bf16.msra.mxu0 %v1002
    %1391 = vmatprep.subr.bf16.mxu0 0
    %1392 = vmatpush1.bf16.msra.mxu0 %v1001
    %1393 = vmatprep.subr.bf16.mxu0 0
    %1394 = vmatpush2.bf16.msra.mxu0 %v1016
    %1395 = vmatprep.subr.bf16.mxu0 0
    %1396 = vmatpush2.bf16.msra.mxu0 %v1015
    %1397 = vmatprep.subr.bf16.mxu0 0
    %1398 = vmatpush2.bf16.msra.mxu0 %v1014
    %1399 = vmatprep.subr.bf16.mxu0 0
    %1400 = vmatpush2.bf16.msra.mxu0 %v1013
    %1401 = vmatprep.subr.bf16.mxu0 0
    %1402 = vmatpush2.bf16.msra.mxu0 %v1012
    %1403 = vmatprep.subr.bf16.mxu0 0
    %1404 = vmatpush2.bf16.msra.mxu0 %v1011
    %1405 = vmatprep.subr.bf16.mxu0 0
    %1406 = vmatpush2.bf16.msra.mxu0 %v1010
    %1407 = vmatprep.subr.bf16.mxu0 0
    %1408 = vmatpush2.bf16.msra.mxu0 %v1009
    %1409 = vmatprep.mubr.bf16.mxu0 %v391
    %1410 = vmatmul.mubr.bf16.gmra.mxu0 %v389
    %v1411 = vpop.f32.mrf.mxu0
    %v1412 = vadd.f32 %v1372, %v1411
    %v1413 = vpop.f32.mrf.mxu0
    %v1414 = vpop.f32.mrf.mxu0
    %v1415 = vpop.f32.mrf.mxu0
    %1416 = vdwg.mxu0
    %1417 = vmatprep.subr.bf16.mxu0 0
    %1418 = vmatpush1.bf16.msra.mxu0 %v1024
    %1419 = vmatprep.subr.bf16.mxu0 0
    %1420 = vmatpush1.bf16.msra.mxu0 %v1023
    %1421 = vmatprep.subr.bf16.mxu0 0
    %1422 = vmatpush1.bf16.msra.mxu0 %v1022
    %1423 = vmatprep.subr.bf16.mxu0 0
    %1424 = vmatpush1.bf16.msra.mxu0 %v1021
    %1425 = vmatprep.subr.bf16.mxu0 0
    %1426 = vmatpush1.bf16.msra.mxu0 %v1020
    %1427 = vmatprep.subr.bf16.mxu0 0
    %1428 = vmatpush1.bf16.msra.mxu0 %v1019
    %1429 = vmatprep.subr.bf16.mxu0 0
    %1430 = vmatpush1.bf16.msra.mxu0 %v1018
    %1431 = vmatprep.subr.bf16.mxu0 0
    %1432 = vmatpush1.bf16.msra.mxu0 %v1017
    %1433 = vmatprep.subr.bf16.mxu0 0
    %1434 = vmatpush2.bf16.msra.mxu0 %v1032
    %1435 = vmatprep.subr.bf16.mxu0 0
    %1436 = vmatpush2.bf16.msra.mxu0 %v1031
    %1437 = vmatprep.subr.bf16.mxu0 0
    %1438 = vmatpush2.bf16.msra.mxu0 %v1030
    %1439 = vmatprep.subr.bf16.mxu0 0
    %1440 = vmatpush2.bf16.msra.mxu0 %v1029
    %1441 = vmatprep.subr.bf16.mxu0 0
    %1442 = vmatpush2.bf16.msra.mxu0 %v1028
    %1443 = vmatprep.subr.bf16.mxu0 0
    %1444 = vmatpush2.bf16.msra.mxu0 %v1027
    %1445 = vmatprep.subr.bf16.mxu0 0
    %1446 = vmatpush2.bf16.msra.mxu0 %v1026
    %1447 = vmatprep.subr.bf16.mxu0 0
    %1448 = vmatpush2.bf16.msra.mxu0 %v1025
    %1449 = vmatprep.mubr.bf16.mxu0 %v388
    %1450 = vmatmul.mubr.bf16.gmra.mxu0 %v374
    %v1451 = vpop.f32.mrf.mxu0
    %v1452 = vadd.f32 %v1412, %v1451
    %v1453 = vpop.f32.mrf.mxu0
    %v1454 = vpop.f32.mrf.mxu0
    %v1455 = vpop.f32.mrf.mxu0
    %1456 = vdwg.mxu0
    %1457 = vmatprep.subr.bf16.mxu0 0
    %1458 = vmatpush1.bf16.msra.mxu0 %v1040
    %1459 = vmatprep.subr.bf16.mxu0 0
    %1460 = vmatpush1.bf16.msra.mxu0 %v1039
    %1461 = vmatprep.subr.bf16.mxu0 0
    %1462 = vmatpush1.bf16.msra.mxu0 %v1038
    %1463 = vmatprep.subr.bf16.mxu0 0
    %1464 = vmatpush1.bf16.msra.mxu0 %v1037
    %1465 = vmatprep.subr.bf16.mxu0 0
    %1466 = vmatpush1.bf16.msra.mxu0 %v1036
    %1467 = vmatprep.subr.bf16.mxu0 0
    %1468 = vmatpush1.bf16.msra.mxu0 %v1035
    %1469 = vmatprep.subr.bf16.mxu0 0
    %1470 = vmatpush1.bf16.msra.mxu0 %v1034
    %1471 = vmatprep.subr.bf16.mxu0 0
    %1472 = vmatpush1.bf16.msra.mxu0 %v1033
    %1473 = vmatprep.subr.bf16.mxu0 0
    %1474 = vmatpush2.bf16.msra.mxu0 %v1048
    %1475 = vmatprep.subr.bf16.mxu0 0
    %1476 = vmatpush2.bf16.msra.mxu0 %v1047
    %1477 = vmatprep.subr.bf16.mxu0 0
    %1478 = vmatpush2.bf16.msra.mxu0 %v1046
    %1479 = vmatprep.subr.bf16.mxu0 0
    %1480 = vmatpush2.bf16.msra.mxu0 %v1045
    %1481 = vmatprep.subr.bf16.mxu0 0
    %1482 = vmatpush2.bf16.msra.mxu0 %v1044
    %1483 = vmatprep.subr.bf16.mxu0 0
    %1484 = vmatpush2.bf16.msra.mxu0 %v1043
    %1485 = vmatprep.subr.bf16.mxu0 0
    %1486 = vmatpush2.bf16.msra.mxu0 %v1042
    %1487 = vmatprep.subr.bf16.mxu0 0
    %1488 = vmatpush2.bf16.msra.mxu0 %v1041
    %1489 = vmatprep.mubr.bf16.mxu0 %v392
    %1490 = vmatmul.mubr.bf16.gmra.mxu0 %v390
    %v1491 = vpop.f32.mrf.mxu0
    %v1492 = vadd.f32 %v1452, %v1491
    %v1493 = vpop.f32.mrf.mxu0
    %v1494 = vpop.f32.mrf.mxu0
    %v1495 = vpop.f32.mrf.mxu0
    %1496 = vdwg.mxu0
    %v1497 = vmax.f32 %v1492, 0.0
    %v1498 = vpack.c.bf16 %v1497, %v1497
    %v1499 = vld [vmem:[%s3] sm:$0xf]
    %v1500 = vld [vmem:[%s3 + $0x4] sm:$0xf]
    %v1501 = vld [vmem:[%s3 + $0x8] sm:$0xf]
    %v1502 = vld [vmem:[%s3 + $0xc] sm:$0xf]
    %v1503 = vld [vmem:[%s3 + $0x10] sm:$0xf]
    %v1504 = vld [vmem:[%s3 + $0x14] sm:$0xf]
    %v1505 = vld [vmem:[%s3 + $0x18] sm:$0xf]
    %v1506 = vld [vmem:[%s3 + $0x1c] sm:$0xf]
    %v1507 = vld [vmem:[%s3 + $0x20] sm:$0xf]
    %v1508 = vld [vmem:[%s3 + $0x24] sm:$0xf]
    %v1509 = vld [vmem:[%s3 + $0x28] sm:$0xf]
    %v1510 = vld [vmem:[%s3 + $0x2c] sm:$0xf]
    %v1511 = vld [vmem:[%s3 + $0x30] sm:$0xf]
    %v1512 = vld [vmem:[%s3 + $0x34] sm:$0xf]
    %v1513 = vld [vmem:[%s3 + $0x38] sm:$0xf]
    %v1514 = vld [vmem:[%s3 + $0x3c] sm:$0xf]
    %v1515 = vld [vmem:[%s4] sm:$0x1]
    %v1517 = vlaneseq
    %v1518 = vshrl.u32 %v1517, 7
    %v1519 = vsub.s32 0, %v1518
    %v1520 = vrot.slane %v1515, %v1519
    %v1538 = vunpack.c.l.b16 %v1499
    %v1539 = vunpack.c.l.b16 %v1500
    %v1540 = vunpack.c.l.b16 %v1501
    %v1541 = vunpack.c.l.b16 %v1502
    %v1542 = vunpack.c.l.b16 %v1503
    %v1543 = vunpack.c.l.b16 %v1504
    %v1544 = vunpack.c.l.b16 %v1505
    %v1545 = vunpack.c.l.b16 %v1506
    %v1546 = vunpack.c.l.b16 %v1507
    %v1547 = vunpack.c.l.b16 %v1508
    %v1548 = vunpack.c.l.b16 %v1509
    %v1549 = vunpack.c.l.b16 %v1510
    %v1550 = vunpack.c.l.b16 %v1511
    %v1551 = vunpack.c.l.b16 %v1512
    %v1552 = vunpack.c.l.b16 %v1513
    %v1553 = vunpack.c.l.b16 %v1514
    %v1554 = vpack.c.b16 %v1539, %v1538
    %v1555 = vpack.c.b16 %v1541, %v1540
    %v1556 = vpack.c.b16 %v1543, %v1542
    %v1557 = vpack.c.b16 %v1545, %v1544
    %v1558 = vpack.c.b16 %v1547, %v1546
    %v1559 = vpack.c.b16 %v1549, %v1548
    %v1560 = vpack.c.b16 %v1551, %v1550
    %v1561 = vpack.c.b16 %v1553, %v1552
    %1570 = vmatprep.subr.bf16.mxu0 0
    %1571 = vmatpush1.bf16.msra.mxu0 %v1561
    %1572 = vmatprep.subr.bf16.mxu0 0
    %1573 = vmatpush1.bf16.msra.mxu0 %v1560
    %1574 = vmatprep.subr.bf16.mxu0 0
    %1575 = vmatpush1.bf16.msra.mxu0 %v1559
    %1576 = vmatprep.subr.bf16.mxu0 0
    %1577 = vmatpush1.bf16.msra.mxu0 %v1558
    %1578 = vmatprep.subr.bf16.mxu0 0
    %1579 = vmatpush1.bf16.msra.mxu0 %v1557
    %1580 = vmatprep.subr.bf16.mxu0 0
    %1581 = vmatpush1.bf16.msra.mxu0 %v1556
    %1582 = vmatprep.subr.bf16.mxu0 0
    %1583 = vmatpush1.bf16.msra.mxu0 %v1555
    %1584 = vmatprep.subr.bf16.mxu0 0
    %1585 = vmatpush1.bf16.msra.mxu0 %v1554
    %1586 = vmatprep.subr.bf16.mxu0 0
    %1587 = vmatpush2.bf16.msra.mxu0 0
    %1588 = vmatprep.subr.bf16.mxu0 0
    %1589 = vmatpush2.bf16.msra.mxu0 0
    %1590 = vmatprep.subr.bf16.mxu0 0
    %1591 = vmatpush2.bf16.msra.mxu0 0
    %1592 = vmatprep.subr.bf16.mxu0 0
    %1593 = vmatpush2.bf16.msra.mxu0 0
    %1594 = vmatprep.subr.bf16.mxu0 0
    %1595 = vmatpush2.bf16.msra.mxu0 0
    %1596 = vmatprep.subr.bf16.mxu0 0
    %1597 = vmatpush2.bf16.msra.mxu0 0
    %1598 = vmatprep.subr.bf16.mxu0 0
    %1599 = vmatpush2.bf16.msra.mxu0 0
    %1600 = vmatprep.subr.bf16.mxu0 0
    %1601 = vmatpush2.bf16.msra.mxu0 0
    %1602 = vmatprep.mubr.bf16.mxu0 0
    %1603 = vmatmul.mubr.bf16.gmra.mxu0 %v1498
    %v1604 = vpop.f32.mrf.mxu0
    %v1605 = vadd.f32 %v1520, %v1604
    %v1606 = vpop.f32.mrf.mxu0
    %v1607 = vpop.f32.mrf.mxu0
    %v1608 = vpop.f32.mrf.mxu0
    %1609 = vdwg.mxu0
    %v1610 = vmax.f32 %v1605, 0.0
    %v1611 = vpack.c.bf16 %v1610, %v1610
    %v1612 = vld [vmem:[%s5] sm:$0xf]
    %v1613 = vld [vmem:[%s5 + $0x4] sm:$0xf]
    %v1614 = vld [vmem:[%s5 + $0x8] sm:$0xf]
    %v1615 = vld [vmem:[%s5 + $0xc] sm:$0xf]
    %v1616 = vld [vmem:[%s5 + $0x10] sm:$0xf]
    %v1617 = vld [vmem:[%s5 + $0x14] sm:$0xf]
    %v1618 = vld [vmem:[%s5 + $0x18] sm:$0xf]
    %v1619 = vld [vmem:[%s5 + $0x1c] sm:$0xf]
    %v1620 = vld [vmem:[%s5 + $0x20] sm:$0xf]
    %v1621 = vld [vmem:[%s5 + $0x24] sm:$0xf]
    %v1622 = vld [vmem:[%s5 + $0x28] sm:$0xf]
    %v1623 = vld [vmem:[%s5 + $0x2c] sm:$0xf]
    %v1624 = vld [vmem:[%s5 + $0x30] sm:$0xf]
    %v1625 = vld [vmem:[%s5 + $0x34] sm:$0xf]
    %v1626 = vld [vmem:[%s5 + $0x38] sm:$0xf]
    %v1627 = vld [vmem:[%s5 + $0x3c] sm:$0xf]
    %v1628 = vld [vmem:[%s6] sm:$0x1]
    %v1630 = vlaneseq
    %v1631 = vshrl.u32 %v1630, 7
    %v1632 = vsub.s32 0, %v1631
    %v1633 = vrot.slane %v1628, %v1632
    %v1651 = vunpack.c.l.b16 %v1612
    %v1652 = vunpack.c.l.b16 %v1613
    %v1653 = vunpack.c.l.b16 %v1614
    %v1654 = vunpack.c.l.b16 %v1615
    %v1655 = vunpack.c.l.b16 %v1616
    %v1656 = vunpack.c.l.b16 %v1617
    %v1657 = vunpack.c.l.b16 %v1618
    %v1658 = vunpack.c.l.b16 %v1619
    %v1659 = vunpack.c.l.b16 %v1620
    %v1660 = vunpack.c.l.b16 %v1621
    %v1661 = vunpack.c.l.b16 %v1622
    %v1662 = vunpack.c.l.b16 %v1623
    %v1663 = vunpack.c.l.b16 %v1624
    %v1664 = vunpack.c.l.b16 %v1625
    %v1665 = vunpack.c.l.b16 %v1626
    %v1666 = vunpack.c.l.b16 %v1627
    %v1667 = vpack.c.b16 %v1652, %v1651
    %v1668 = vpack.c.b16 %v1654, %v1653
    %v1669 = vpack.c.b16 %v1656, %v1655
    %v1670 = vpack.c.b16 %v1658, %v1657
    %v1671 = vpack.c.b16 %v1660, %v1659
    %v1672 = vpack.c.b16 %v1662, %v1661
    %v1673 = vpack.c.b16 %v1664, %v1663
    %v1674 = vpack.c.b16 %v1666, %v1665
    %1683 = vmatprep.subr.bf16.mxu0 0
    %1684 = vmatpush1.bf16.msra.mxu0 %v1674
    %1685 = vmatprep.subr.bf16.mxu0 0
    %1686 = vmatpush1.bf16.msra.mxu0 %v1673
    %1687 = vmatprep.subr.bf16.mxu0 0
    %1688 = vmatpush1.bf16.msra.mxu0 %v1672
    %1689 = vmatprep.subr.bf16.mxu0 0
    %1690 = vmatpush1.bf16.msra.mxu0 %v1671
    %1691 = vmatprep.subr.bf16.mxu0 0
    %1692 = vmatpush1.bf16.msra.mxu0 %v1670
    %1693 = vmatprep.subr.bf16.mxu0 0
    %1694 = vmatpush1.bf16.msra.mxu0 %v1669
    %1695 = vmatprep.subr.bf16.mxu0 0
    %1696 = vmatpush1.bf16.msra.mxu0 %v1668
    %1697 = vmatprep.subr.bf16.mxu0 0
    %1698 = vmatpush1.bf16.msra.mxu0 %v1667
    %1699 = vmatprep.subr.bf16.mxu0 0
    %1700 = vmatpush2.bf16.msra.mxu0 0
    %1701 = vmatprep.subr.bf16.mxu0 0
    %1702 = vmatpush2.bf16.msra.mxu0 0
    %1703 = vmatprep.subr.bf16.mxu0 0
    %1704 = vmatpush2.bf16.msra.mxu0 0
    %1705 = vmatprep.subr.bf16.mxu0 0
    %1706 = vmatpush2.bf16.msra.mxu0 0
    %1707 = vmatprep.subr.bf16.mxu0 0
    %1708 = vmatpush2.bf16.msra.mxu0 0
    %1709 = vmatprep.subr.bf16.mxu0 0
    %1710 = vmatpush2.bf16.msra.mxu0 0
    %1711 = vmatprep.subr.bf16.mxu0 0
    %1712 = vmatpush2.bf16.msra.mxu0 0
    %1713 = vmatprep.subr.bf16.mxu0 0
    %1714 = vmatpush2.bf16.msra.mxu0 0
    %1715 = vmatprep.mubr.bf16.mxu0 0
    %1716 = vmatmul.mubr.bf16.gmra.mxu0 %v1611
    %v1717 = vpop.f32.mrf.mxu0
    %v1718 = vadd.f32 %v1633, %v1717
    %v1719 = vpop.f32.mrf.mxu0
    %v1720 = vpop.f32.mrf.mxu0
    %v1721 = vpop.f32.mrf.mxu0
    %1722 = vdwg.mxu0
    %1723 = vst [vmem:[#allocation2] sm:$0x3] %v1718
    // Predicated region
    $region30: #{garment_classifier.5} parent=1 // pred_check
      _
    $region31: #{garment_classifier.5} parent=1 // pred_check_branch
      %1725 = sbr.rel (0) target = $region33
    $region32: #{garment_classifier.5} parent=1 // pred_region
      %s1727 = ssub.s32 32, 32
      %1728 = vsyncadd [#allocation3], %s1727
      %s1730 = sshll.u32 [#allocation2], 4
      %s1731 = int_to_ptr.vmem [resolvable:$true] %s1730
      %1733 = dma.vmem_to_hbm [thread:$0]  %s1731, 32, %s7, [#allocation3]
    $region33: #{garment_classifier.5} parent=1 // pred_fallthru
      _
    // Predicated region
    $region34: #{garment_classifier.5} parent=1 // pred_check
      _
    $region35: #{garment_classifier.5} parent=1 // pred_check_branch
      %1735 = sbr.rel (0) target = $region37
    $region36: #{garment_classifier.5} parent=1 // pred_region
      %1736 = dma.done [#allocation3], 32
    $region37: #{garment_classifier.5} parent=1 // pred_fallthru
      _
    %1737 = vsyncpa [#allocation3], 1

</llo_original>
